<compile_context>
chip_gen: v7x
topology: tpu7x:2x2x1
jax: 0.10.0
libtpu: 0.0.40
codegen_flags: <defaults>
</compile_context>

<pallas_src>
import functools

import jax
import jax.numpy as jnp
from jax.experimental import pallas as pl
from jax.experimental.pallas import tpu as pltpu


def _round_up(v, m):
    return (v + m - 1) // m * m


# --------------------------------------------------------------------------- kernel
def gcn_kernel(x_ref, snp_ref,
               w1_ref, b1_ref,
               w2_ref, b2_ref,
               w3_ref, b3_ref,
               wfc_ref, bfc_ref,
               out_ref, acc_ref, hcat_ref, *, nclass):
    cdt = w1_ref.dtype            # MXU input dtype (bf16 on the fast path, f32 otherwise)
    nhid_p = acc_ref.shape[1]
    k = pl.program_id(1)

    @pl.when(k == 0)
    def _():
        acc_ref[...] = jnp.zeros_like(acc_ref)

    # gcn1 partial sum over this K (nfeat) tile.  x is streamed in its HBM dtype and
    # cast to the MXU dtype here (no wrapper-side pad/cast pass over x).
    acc_ref[...] += jnp.dot(x_ref[...].astype(cdt), w1_ref[...],
                            preferred_element_type=jnp.float32)

    @pl.when(k == pl.num_programs(1) - 1)
    def _():
        # dropout = identity (eval mode); elementwise math stays f32.
        h1 = jnp.maximum(acc_ref[...] + b1_ref[...], 0.0)

        h2 = jnp.dot(h1.astype(cdt), w2_ref[...],
                     preferred_element_type=jnp.float32) + b2_ref[...]
        h2 = jnp.maximum(h2, 0.0)

        hs = jnp.dot(snp_ref[...].astype(cdt), w3_ref[...],
                     preferred_element_type=jnp.float32) + b3_ref[...]
        hs = jnp.maximum(hs, 0.0)

        # fc over the (virtual) concat [x_gcn, x_snp]: pack the halves into the two
        # lane-halves of a VMEM buffer and do a single K=2*nhid_p MXU pass.
        hcat_ref[:, :nhid_p] = h2.astype(cdt)
        hcat_ref[:, nhid_p:] = hs.astype(cdt)
        logits = jnp.dot(hcat_ref[...], wfc_ref[...],
                         preferred_element_type=jnp.float32) + bfc_ref[...]

        # log_softmax over the real classes only (padded class lanes masked out).
        col = jax.lax.broadcasted_iota(jnp.int32, logits.shape, 1)
        logits = jnp.where(col < nclass, logits, jnp.float32(-1e30))
        m = jnp.max(logits, axis=1, keepdims=True)
        lse = m + jnp.log(jnp.sum(jnp.exp(logits - m), axis=1, keepdims=True))
        out_ref[...] = logits - lse


# ----------------------------------------------------------------------- tiling logic
def _vmem_budgets():
    """Generation-aware (tiling budget, vmem_limit_bytes)."""
    mib = 1024 * 1024
    try:
        cap = int(pltpu.get_tpu_info().vmem_capacity_bytes)
    except Exception:
        cap = 64 * mib                      # conservative if the query is unavailable
    if cap >= 100 * mib:                    # v5e / v6e: 128 MiB VMEM per core
        return 96 * mib, 112 * mib
    return 42 * mib, 52 * mib               # v7x: 64 MiB per core (leave headroom)


def _tk_candidates(nfeat_p, cap=4096):
    """Multiples of 128 that divide nfeat_p (descending, capped)."""
    units = nfeat_p // 128
    cands = [d * 128 for d in range(1, units + 1) if units % d == 0 and d * 128 <= cap]
    if not cands:
        cands = [128]
    return sorted(cands, reverse=True)


def _choose_tiles(n, nfeat_p, snp_p, nhid_p, nclass_p, mx_bytes, budget):
    """Pick (tm, tk): keep tm MXU-sized, shrink tk first when VMEM is tight."""
    # Resident (single-buffered) weights: w2, w3, stacked fc weight, biases (f32).
    resident = mx_bytes * (nhid_p * nhid_p + snp_p * nhid_p + 2 * nhid_p * nclass_p)
    resident += 4 * (3 * nhid_p + nclass_p)

    if n >= 128:
        cap = _round_up(n, 128)
        tm_cands = [t for t in (512, 384, 256, 128) if t <= cap] or [128]
    else:
        tm_cands = [_round_up(max(n, 1), 16)]   # >=16 so bf16 vregs pack fully
    tk_cands = _tk_candidates(nfeat_p)

    def vmem_need(tm, tk):
        w1_stream = 2 * tk * nhid_p * mx_bytes             # w1 tile, double-buffered
        x_stream = 2 * tm * tk * 4                         # x streamed in f32
        snp_stream = 2 * tm * snp_p * 4
        out_stream = 2 * tm * nclass_p * 4
        scratch = tm * nhid_p * 4 + tm * 2 * nhid_p * mx_bytes   # acc + hcat
        live = tm * (3 * nhid_p + 2 * nclass_p) * 4              # h1/h2/hs/logits temps
        return resident + w1_stream + x_stream + snp_stream + out_stream + scratch + live

    for tm in tm_cands:                 # keep tm as large as possible...
        for tk in tk_cands:             # ...and shrink tk before tm
            if vmem_need(tm, tk) <= budget:
                return tm, tk
    return tm_cands[-1], tk_cands[-1]


# ---------------------------------------------------------------------------- wrapper
def gcn_forward(x, adj, snp_features, params, *, use_bf16=True):
    # `adj` intentionally unused (matches the PyTorch forward).
    del adj
    # PyTorch truncation when batch sizes differ.
    n = min(x.shape[0], snp_features.shape[0])
    x = x[:n]
    snp_features = snp_features[:n]

    w1, b1, w2, b2, w3, b3, wfc, bfc = params
    nhid, nfeat = w1.shape
    snp_dim = w3.shape[1]
    nclass = wfc.shape[0]

    # Lane-pad all feature dims to multiples of 128.
    nfeat_p = _round_up(nfeat, 128)
    snp_p = _round_up(snp_dim, 128)
    nhid_p = _round_up(nhid, 128)
    nclass_p = _round_up(nclass, 128)

    cdt = jnp.bfloat16 if use_bf16 else jnp.float32
    mx_bytes = 2 if use_bf16 else 4

    budget, vmem_limit = _vmem_budgets()
    tm, tk = _choose_tiles(n, nfeat_p, snp_p, nhid_p, nclass_p, mx_bytes, budget)
    n_p = _round_up(max(n, 1), tm)
    grid = (n_p // tm, nfeat_p // tk)

    # Activations stay in their original dtype (cast inside the kernel); pad only
    # when the shape is not already aligned, so no extra HBM pass in the common case.
    def pad_act(a, rows, cols):
        if a.shape == (rows, cols):
            return a
        return jnp.pad(a, ((0, rows - a.shape[0]), (0, cols - a.shape[1])))

    x_in = pad_act(x, n_p, nfeat_p)
    snp_in = pad_act(snp_features, n_p, snp_p)

    def pad2(a, rows, cols, dtype):
        a = a.astype(dtype)
        return jnp.pad(a, ((0, rows - a.shape[0]), (0, cols - a.shape[1])))

    # Pre-transpose Linear weights to [in, out]; stack the fc halves [gcn; snp].
    w1_t = pad2(w1.T, nfeat_p, nhid_p, cdt)                      # [nfeat_p, nhid_p]
    w2_t = pad2(w2.T, nhid_p, nhid_p, cdt)                       # [nhid_p,  nhid_p]
    w3_t = pad2(w3.T, snp_p, nhid_p, cdt)                        # [snp_p,   nhid_p]
    wfc_st = jnp.concatenate(
        [pad2(wfc[:, :nhid].T, nhid_p, nclass_p, cdt),
         pad2(wfc[:, nhid:].T, nhid_p, nclass_p, cdt)], axis=0)  # [2*nhid_p, nclass_p]

    # Biases stay f32 (elementwise path), padded with zeros.
    b1_2d = pad2(b1.reshape(1, -1), 1, nhid_p, jnp.float32)
    b2_2d = pad2(b2.reshape(1, -1), 1, nhid_p, jnp.float32)
    b3_2d = pad2(b3.reshape(1, -1), 1, nhid_p, jnp.float32)
    bfc_2d = pad2(bfc.reshape(1, -1), 1, nclass_p, jnp.float32)

    def call(single_buffer_weights):
        def resident(r, c):
            # Constant-index weights don't need double buffers.
            if single_buffer_weights:
                return pl.BlockSpec((r, c), lambda i, k: (0, 0),
                                    pipeline_mode=pl.Buffered(1))
            return pl.BlockSpec((r, c), lambda i, k: (0, 0))

        in_specs = [
            pl.BlockSpec((tm, tk), lambda i, k: (i, k)),       # x (streams batch & K)
            pl.BlockSpec((tm, snp_p), lambda i, k: (i, 0)),    # snp (streams batch)
            pl.BlockSpec((tk, nhid_p), lambda i, k: (k, 0)),   # w1 (streams K)
            resident(1, nhid_p),                               # b1
            resident(nhid_p, nhid_p),                          # w2
            resident(1, nhid_p),                               # b2
            resident(snp_p, nhid_p),                           # w3
            resident(1, nhid_p),                               # b3
            resident(2 * nhid_p, nclass_p),                    # wfc (stacked halves)
            resident(1, nclass_p),                             # bfc
        ]
        out_spec = pl.BlockSpec((tm, nclass_p), lambda i, k: (i, 0))

        return pl.pallas_call(
            functools.partial(gcn_kernel, nclass=nclass),
            out_shape=jax.ShapeDtypeStruct((n_p, nclass_p), jnp.float32),
            grid=grid,
            in_specs=in_specs,
            out_specs=out_spec,
            scratch_shapes=[
                pltpu.VMEM((tm, nhid_p), jnp.float32),     # gcn1 f32 accumulator
                pltpu.VMEM((tm, 2 * nhid_p), cdt),         # fused-fc concat buffer
            ],
            compiler_params=pltpu.CompilerParams(
                dimension_semantics=("parallel", "arbitrary"),
                vmem_limit_bytes=vmem_limit,
            ),
        )(x_in, snp_in, w1_t, b1_2d, w2_t, b2_2d, w3_t, b3_2d, wfc_st, bfc_2d)

    want_single = hasattr(pl, "Buffered")
    try:
        out = call(want_single)
    except Exception:
        if not want_single:
            raise
        out = call(False)    # fall back to default double-buffered resident weights

    # Strip batch / class padding.
    return out[:n, :nclass]


# --------------------------------------------------------------------- params & reference
def init_params(key, nfeat, nhid, nclass, snp_feat_dim):
    ks = jax.random.split(key, 8)

    def linear(kw, kb, fan_in, fan_out):
        bound = 1.0 / jnp.sqrt(fan_in)
        w = jax.random.uniform(kw, (fan_out, fan_in), jnp.float32, -bound, bound)
        b = jax.random.uniform(kb, (fan_out,), jnp.float32, -bound, bound)
        return w, b

    w1, b1 = linear(ks[0], ks[1], nfeat, nhid)
    w2, b2 = linear(ks[2], ks[3], nhid, nhid)
    w3, b3 = linear(ks[4], ks[5], snp_feat_dim, nhid)
    wfc, bfc = linear(ks[6], ks[7], nhid * 2, nclass)
    return (w1, b1, w2, b2, w3, b3, wfc, bfc)


def gcn_reference(x, snp_features, params, matmul_dtype=jnp.float32):
    """Pure-JAX reference; matmul inputs cast to `matmul_dtype`, accumulation f32."""
    w1, b1, w2, b2, w3, b3, wfc, bfc = params

    def mm(a, w):
        return jnp.dot(a.astype(matmul_dtype), w.T.astype(matmul_dtype),
                       preferred_element_type=jnp.float32)

    h1 = jax.nn.relu(mm(x, w1) + b1)
    h2 = jax.nn.relu(mm(h1, w2) + b2)
    hs = jax.nn.relu(mm(snp_features, w3) + b3)
    logits = mm(jnp.concatenate([h2, hs], axis=1), wfc) + bfc
    return jax.nn.log_softmax(logits, axis=1)


# ------------------------------------------------------------------------------- main
if __name__ == "__main__":
    # Small shapes consistent with the module's forward.
    N, nfeat, nhid, nclass, snp_feat_dim = 8, 16, 32, 4, 8

    key = jax.random.PRNGKey(0)
    k_x, k_adj, k_snp, k_p = jax.random.split(key, 4)
    x = jax.random.normal(k_x, (N, nfeat), jnp.float32)
    adj = jax.random.normal(k_adj, (N, N), jnp.float32)       # unused, as in PyTorch
    snp = jax.random.normal(k_snp, (N, snp_feat_dim), jnp.float32)
    params = init_params(k_p, nfeat, nhid, nclass, snp_feat_dim)

    # f32 path: semantics check against the pure-f32 reference.
    out_f32 = jax.block_until_ready(gcn_forward(x, adj, snp, params, use_bf16=False))
    ref_f32 = gcn_reference(x, snp, params, matmul_dtype=jnp.float32)
    assert out_f32.shape == (N, nclass)
    assert jnp.allclose(out_f32, ref_f32, atol=1e-4, rtol=1e-4), "f32 mismatch vs reference"

    # bf16 MXU path (default / performance path): compare against bf16-matched reference.
    out_bf16 = jax.block_until_ready(gcn_forward(x, adj, snp, params, use_bf16=True))
    ref_bf16 = gcn_reference(x, snp, params, matmul_dtype=jnp.bfloat16)
    assert out_bf16.shape == (N, nclass)
    assert jnp.allclose(out_bf16, ref_bf16, atol=2e-3, rtol=2e-3), "bf16 mismatch vs reference"

    # TODO(synk): dropout is implemented as identity (eval mode); training-mode dropout
    # would need pltpu.prng_seed/prng_random_bits inside the kernel.
    print("KERNEL_OK")
</pallas_src>

<mosaic_0001>
module attributes {stable_mosaic.version = 11 : i64} {
  func.func @gcn_kernel(%arg0: i32, %arg1: i32, %arg2: memref<16x128xf32, #tpu.memory_space<vmem>>, %arg3: memref<16x128xf32, #tpu.memory_space<vmem>>, %arg4: memref<128x128xf32, #tpu.memory_space<vmem>>, %arg5: memref<1x128xf32, #tpu.memory_space<vmem>>, %arg6: memref<128x128xf32, #tpu.memory_space<vmem>>, %arg7: memref<1x128xf32, #tpu.memory_space<vmem>>, %arg8: memref<128x128xf32, #tpu.memory_space<vmem>>, %arg9: memref<1x128xf32, #tpu.memory_space<vmem>>, %arg10: memref<256x128xf32, #tpu.memory_space<vmem>>, %arg11: memref<1x128xf32, #tpu.memory_space<vmem>>, %arg12: memref<16x128xf32, #tpu.memory_space<vmem>>, %arg13: memref<16x128xf32, #tpu.memory_space<vmem>>, %arg14: memref<16x256xf32, #tpu.memory_space<vmem>>) attributes {dimension_semantics = [#tpu.dimension_semantics<parallel>, #tpu.dimension_semantics<arbitrary>], iteration_bounds = array<i64: 1, 1>, scalar_prefetch = 0 : i64, scratch_operands = 2 : i64, tpu.core_type = #tpu.core_type<tc>, window_params = [{transform_indices = @transform_0, window_bounds = array<i64: 16, 128>}, {transform_indices = @transform_1, window_bounds = array<i64: 16, 128>}, {transform_indices = @transform_2, window_bounds = array<i64: 128, 128>}, {pipeline_mode = #tpu.pipeline_mode<synchronous>, transform_indices = @transform_3, window_bounds = array<i64: 1, 128>}, {pipeline_mode = #tpu.pipeline_mode<synchronous>, transform_indices = @transform_4, window_bounds = array<i64: 128, 128>}, {pipeline_mode = #tpu.pipeline_mode<synchronous>, transform_indices = @transform_5, window_bounds = array<i64: 1, 128>}, {pipeline_mode = #tpu.pipeline_mode<synchronous>, transform_indices = @transform_6, window_bounds = array<i64: 128, 128>}, {pipeline_mode = #tpu.pipeline_mode<synchronous>, transform_indices = @transform_7, window_bounds = array<i64: 1, 128>}, {pipeline_mode = #tpu.pipeline_mode<synchronous>, transform_indices = @transform_8, window_bounds = array<i64: 256, 128>}, {pipeline_mode = #tpu.pipeline_mode<synchronous>, transform_indices = @transform_9, window_bounds = array<i64: 1, 128>}, {transform_indices = @transform_10, window_bounds = array<i64: 16, 128>}]} {
    %c0_i32 = arith.constant 0 : i32
    %0 = arith.cmpi eq, %arg1, %c0_i32 : i32
    %1 = arith.extui %0 : i1 to i32
    %c0_i32_0 = arith.constant 0 : i32
    %2 = arith.cmpi ne, %1, %c0_i32_0 : i32
    scf.if %2 {
      %cst_10 = arith.constant 0.000000e+00 : f32
      %12 = vector.broadcast %cst_10 : f32 to vector<16x128xf32>
      %c0_11 = arith.constant 0 : index
      %c0_12 = arith.constant 0 : index
      %13 = vector.load %arg13[%c0_11, %c0_12] : memref<16x128xf32, #tpu.memory_space<vmem>>, vector<16x128xf32>
      tpu.vector_store %arg13[%c0_11, %c0_12], %12 {strides = array<i32>} : memref<16x128xf32, #tpu.memory_space<vmem>>, vector<16x128xf32>,
    } else {
    }
    %c0 = arith.constant 0 : index
    %c0_1 = arith.constant 0 : index
    %3 = vector.load %arg13[%c0, %c0_1] : memref<16x128xf32, #tpu.memory_space<vmem>>, vector<16x128xf32>
    %c0_2 = arith.constant 0 : index
    %c0_3 = arith.constant 0 : index
    %4 = vector.load %arg2[%c0_2, %c0_3] : memref<16x128xf32, #tpu.memory_space<vmem>>, vector<16x128xf32>
    %c0_4 = arith.constant 0 : index
    %c0_5 = arith.constant 0 : index
    %5 = vector.load %arg4[%c0_4, %c0_5] : memref<128x128xf32, #tpu.memory_space<vmem>>, vector<128x128xf32>
    %cst = arith.constant dense<0.000000e+00> : vector<16x128xf32>
    %6 = tpu.matmul %4, %5, %cst {dimension_numbers = #tpu.dot_dimension_numbers<[1], [0], [0], [1], [0, 0, 1, 1], [], []>} : vector<16x128xf32>, vector<128x128xf32>, vector<16x128xf32> -> vector<16x128xf32>
    %7 = arith.addf %3, %6 : vector<16x128xf32>
    %c0_6 = arith.constant 0 : index
    %c0_7 = arith.constant 0 : index
    %8 = vector.load %arg13[%c0_6, %c0_7] : memref<16x128xf32, #tpu.memory_space<vmem>>, vector<16x128xf32>
    tpu.vector_store %arg13[%c0_6, %c0_7], %7 {strides = array<i32>} : memref<16x128xf32, #tpu.memory_space<vmem>>, vector<16x128xf32>,
    %c0_i32_8 = arith.constant 0 : i32
    %9 = arith.cmpi eq, %arg1, %c0_i32_8 : i32
    %10 = arith.extui %9 : i1 to i32
    %c0_i32_9 = arith.constant 0 : i32
    %11 = arith.cmpi ne, %10, %c0_i32_9 : i32
    scf.if %11 {
      %c0_10 = arith.constant 0 : index
      %c0_11 = arith.constant 0 : index
      %12 = vector.load %arg13[%c0_10, %c0_11] : memref<16x128xf32, #tpu.memory_space<vmem>>, vector<16x128xf32>
      %c0_12 = arith.constant 0 : index
      %c0_13 = arith.constant 0 : index
      %13 = vector.load %arg5[%c0_12, %c0_13] : memref<1x128xf32, #tpu.memory_space<vmem>>, vector<1x128xf32>
      %14 = vector.broadcast %13 : vector<1x128xf32> to vector<16x128xf32>
      %15 = arith.addf %12, %14 : vector<16x128xf32>
      %cst_14 = arith.constant 0.000000e+00 : f32
      %16 = vector.broadcast %cst_14 : f32 to vector<16x128xf32>
      %17 = arith.maximumf %15, %16 : vector<16x128xf32>
      %c0_15 = arith.constant 0 : index
      %c0_16 = arith.constant 0 : index
      %18 = vector.load %arg6[%c0_15, %c0_16] : memref<128x128xf32, #tpu.memory_space<vmem>>, vector<128x128xf32>
      %cst_17 = arith.constant dense<0.000000e+00> : vector<16x128xf32>
      %19 = tpu.matmul %17, %18, %cst_17 {dimension_numbers = #tpu.dot_dimension_numbers<[1], [0], [0], [1], [0, 0, 1, 1], [], []>} : vector<16x128xf32>, vector<128x128xf32>, vector<16x128xf32> -> vector<16x128xf32>
      %c0_18 = arith.constant 0 : index
      %c0_19 = arith.constant 0 : index
      %20 = vector.load %arg7[%c0_18, %c0_19] : memref<1x128xf32, #tpu.memory_space<vmem>>, vector<1x128xf32>
      %21 = vector.broadcast %20 : vector<1x128xf32> to vector<16x128xf32>
      %22 = arith.addf %19, %21 : vector<16x128xf32>
      %cst_20 = arith.constant 0.000000e+00 : f32
      %23 = vector.broadcast %cst_20 : f32 to vector<16x128xf32>
      %24 = arith.maximumf %22, %23 : vector<16x128xf32>
      %c0_21 = arith.constant 0 : index
      %c0_22 = arith.constant 0 : index
      %25 = vector.load %arg3[%c0_21, %c0_22] : memref<16x128xf32, #tpu.memory_space<vmem>>, vector<16x128xf32>
      %c0_23 = arith.constant 0 : index
      %c0_24 = arith.constant 0 : index
      %26 = vector.load %arg8[%c0_23, %c0_24] : memref<128x128xf32, #tpu.memory_space<vmem>>, vector<128x128xf32>
      %cst_25 = arith.constant dense<0.000000e+00> : vector<16x128xf32>
      %27 = tpu.matmul %25, %26, %cst_25 {dimension_numbers = #tpu.dot_dimension_numbers<[1], [0], [0], [1], [0, 0, 1, 1], [], []>} : vector<16x128xf32>, vector<128x128xf32>, vector<16x128xf32> -> vector<16x128xf32>
      %c0_26 = arith.constant 0 : index
      %c0_27 = arith.constant 0 : index
      %28 = vector.load %arg9[%c0_26, %c0_27] : memref<1x128xf32, #tpu.memory_space<vmem>>, vector<1x128xf32>
      %29 = vector.broadcast %28 : vector<1x128xf32> to vector<16x128xf32>
      %30 = arith.addf %27, %29 : vector<16x128xf32>
      %cst_28 = arith.constant 0.000000e+00 : f32
      %31 = vector.broadcast %cst_28 : f32 to vector<16x128xf32>
      %32 = arith.maximumf %30, %31 : vector<16x128xf32>
      %c0_29 = arith.constant 0 : index
      %c0_30 = arith.constant 0 : index
      %33 = vector.load %arg14[%c0_29, %c0_30] : memref<16x256xf32, #tpu.memory_space<vmem>>, vector<16x128xf32>
      tpu.vector_store %arg14[%c0_29, %c0_30], %24 {strides = array<i32>} : memref<16x256xf32, #tpu.memory_space<vmem>>, vector<16x128xf32>,
      %c0_31 = arith.constant 0 : index
      %c128 = arith.constant 128 : index
      %34 = vector.load %arg14[%c0_31, %c128] : memref<16x256xf32, #tpu.memory_space<vmem>>, vector<16x128xf32>
      tpu.vector_store %arg14[%c0_31, %c128], %32 {strides = array<i32>} : memref<16x256xf32, #tpu.memory_space<vmem>>, vector<16x128xf32>,
      %c0_32 = arith.constant 0 : index
      %c0_33 = arith.constant 0 : index
      %35 = vector.load %arg14[%c0_32, %c0_33] : memref<16x256xf32, #tpu.memory_space<vmem>>, vector<16x256xf32>
      %c0_34 = arith.constant 0 : index
      %c0_35 = arith.constant 0 : index
      %36 = vector.load %arg10[%c0_34, %c0_35] : memref<256x128xf32, #tpu.memory_space<vmem>>, vector<256x128xf32>
      %cst_36 = arith.constant dense<0.000000e+00> : vector<16x128xf32>
      %37 = tpu.matmul %35, %36, %cst_36 {dimension_numbers = #tpu.dot_dimension_numbers<[1], [0], [0], [1], [0, 0, 1, 1], [], []>} : vector<16x256xf32>, vector<256x128xf32>, vector<16x128xf32> -> vector<16x128xf32>
      %c0_37 = arith.constant 0 : index
      %c0_38 = arith.constant 0 : index
      %38 = vector.load %arg11[%c0_37, %c0_38] : memref<1x128xf32, #tpu.memory_space<vmem>>, vector<1x128xf32>
      %39 = vector.broadcast %38 : vector<1x128xf32> to vector<16x128xf32>
      %40 = arith.addf %37, %39 : vector<16x128xf32>
      %41 = tpu.iota {dimensions = array<i32: 1>} : vector<16x128xi32>
      %c4_i32 = arith.constant 4 : i32
      %42 = vector.broadcast %c4_i32 : i32 to vector<16x128xi32>
      %43 = arith.cmpi slt, %41, %42 : vector<16x128xi32>
      %cst_39 = arith.constant -1.000000e+30 : f32
      %44 = vector.broadcast %cst_39 : f32 to vector<16x128xf32>
      %45 = arith.select %43, %40, %44 : vector<16x128xi1>, vector<16x128xf32>
      %cst_40 = arith.constant dense<0xFF800000> : vector<16xf32>
      %46 = vector.multi_reduction <maximumf>, %45, %cst_40 [1] : vector<16x128xf32> to vector<16xf32>
      %47 = vector.shape_cast %46 : vector<16xf32> to vector<16x1xf32>
      %48 = vector.broadcast %47 : vector<16x1xf32> to vector<16x128xf32>
      %49 = arith.subf %45, %48 : vector<16x128xf32>
      %50 = math.exp %49 : vector<16x128xf32>
      %cst_41 = arith.constant dense<0.000000e+00> : vector<16xf32>
      %51 = vector.multi_reduction <add>, %50, %cst_41 [1] : vector<16x128xf32> to vector<16xf32>
      %52 = vector.shape_cast %51 : vector<16xf32> to vector<16x1xf32>
      %53 = math.log %52 : vector<16x1xf32>
      %54 = arith.addf %47, %53 : vector<16x1xf32>
      %55 = vector.broadcast %54 : vector<16x1xf32> to vector<16x128xf32>
      %56 = arith.subf %45, %55 : vector<16x128xf32>
      %c0_42 = arith.constant 0 : index
      %c0_43 = arith.constant 0 : index
      %57 = vector.load %arg12[%c0_42, %c0_43] : memref<16x128xf32, #tpu.memory_space<vmem>>, vector<16x128xf32>
      tpu.vector_store %arg12[%c0_42, %c0_43], %56 {strides = array<i32>} : memref<16x128xf32, #tpu.memory_space<vmem>>, vector<16x128xf32>,
    } else {
    }
    return
  }
  func.func @transform_0(%arg0: i32, %arg1: i32) -> (i32, i32) {
    %c0_i32 = arith.constant 0 : i32
    return %arg0, %arg1 : i32, i32
  }
  func.func @transform_1(%arg0: i32, %arg1: i32) -> (i32, i32) {
    %c0_i32 = arith.constant 0 : i32
    %c0_i32_0 = arith.constant 0 : i32
    return %arg0, %c0_i32 : i32, i32
  }
  func.func @transform_2(%arg0: i32, %arg1: i32) -> (i32, i32) {
    %c0_i32 = arith.constant 0 : i32
    %c0_i32_0 = arith.constant 0 : i32
    return %arg1, %c0_i32 : i32, i32
  }
  func.func @transform_3(%arg0: i32, %arg1: i32) -> (i32, i32) {
    %c0_i32 = arith.constant 0 : i32
    %c0_i32_0 = arith.constant 0 : i32
    %c0_i32_1 = arith.constant 0 : i32
    return %c0_i32, %c0_i32_0 : i32, i32
  }
  func.func @transform_4(%arg0: i32, %arg1: i32) -> (i32, i32) {
    %c0_i32 = arith.constant 0 : i32
    %c0_i32_0 = arith.constant 0 : i32
    %c0_i32_1 = arith.constant 0 : i32
    return %c0_i32, %c0_i32_0 : i32, i32
  }
  func.func @transform_5(%arg0: i32, %arg1: i32) -> (i32, i32) {
    %c0_i32 = arith.constant 0 : i32
    %c0_i32_0 = arith.constant 0 : i32
    %c0_i32_1 = arith.constant 0 : i32
    return %c0_i32, %c0_i32_0 : i32, i32
  }
  func.func @transform_6(%arg0: i32, %arg1: i32) -> (i32, i32) {
    %c0_i32 = arith.constant 0 : i32
    %c0_i32_0 = arith.constant 0 : i32
    %c0_i32_1 = arith.constant 0 : i32
    return %c0_i32, %c0_i32_0 : i32, i32
  }
  func.func @transform_7(%arg0: i32, %arg1: i32) -> (i32, i32) {
    %c0_i32 = arith.constant 0 : i32
    %c0_i32_0 = arith.constant 0 : i32
    %c0_i32_1 = arith.constant 0 : i32
    return %c0_i32, %c0_i32_0 : i32, i32
  }
  func.func @transform_8(%arg0: i32, %arg1: i32) -> (i32, i32) {
    %c0_i32 = arith.constant 0 : i32
    %c0_i32_0 = arith.constant 0 : i32
    %c0_i32_1 = arith.constant 0 : i32
    return %c0_i32, %c0_i32_0 : i32, i32
  }
  func.func @transform_9(%arg0: i32, %arg1: i32) -> (i32, i32) {
    %c0_i32 = arith.constant 0 : i32
    %c0_i32_0 = arith.constant 0 : i32
    %c0_i32_1 = arith.constant 0 : i32
    return %c0_i32, %c0_i32_0 : i32, i32
  }
  func.func @transform_10(%arg0: i32, %arg1: i32) -> (i32, i32) {
    %c0_i32 = arith.constant 0 : i32
    %c0_i32_0 = arith.constant 0 : i32
    return %arg0, %c0_i32 : i32, i32
  }
}

module attributes {stable_mosaic.version = 11 : i64} {
  func.func @gcn_kernel(%arg0: i32, %arg1: i32, %arg2: memref<16x128xf32, #tpu.memory_space<vmem>>, %arg3: memref<16x128xf32, #tpu.memory_space<vmem>>, %arg4: memref<128x128xf32, #tpu.memory_space<vmem>>, %arg5: memref<1x128xf32, #tpu.memory_space<vmem>>, %arg6: memref<128x128xf32, #tpu.memory_space<vmem>>, %arg7: memref<1x128xf32, #tpu.memory_space<vmem>>, %arg8: memref<128x128xf32, #tpu.memory_space<vmem>>, %arg9: memref<1x128xf32, #tpu.memory_space<vmem>>, %arg10: memref<256x128xf32, #tpu.memory_space<vmem>>, %arg11: memref<1x128xf32, #tpu.memory_space<vmem>>, %arg12: memref<16x128xf32, #tpu.memory_space<vmem>>, %arg13: memref<16x128xf32, #tpu.memory_space<vmem>>, %arg14: memref<16x256xf32, #tpu.memory_space<vmem>>) attributes {dimension_semantics = [#tpu.dimension_semantics<parallel>, #tpu.dimension_semantics<arbitrary>], iteration_bounds = array<i64: 1, 1>, scalar_prefetch = 0 : i64, scratch_operands = 2 : i64, tpu.core_type = #tpu.core_type<tc>, window_params = [{transform_indices = @transform_0, window_bounds = array<i64: 16, 128>}, {transform_indices = @transform_1, window_bounds = array<i64: 16, 128>}, {transform_indices = @transform_2, window_bounds = array<i64: 128, 128>}, {pipeline_mode = #tpu.pipeline_mode<synchronous>, transform_indices = @transform_3, window_bounds = array<i64: 1, 128>}, {pipeline_mode = #tpu.pipeline_mode<synchronous>, transform_indices = @transform_4, window_bounds = array<i64: 128, 128>}, {pipeline_mode = #tpu.pipeline_mode<synchronous>, transform_indices = @transform_5, window_bounds = array<i64: 1, 128>}, {pipeline_mode = #tpu.pipeline_mode<synchronous>, transform_indices = @transform_6, window_bounds = array<i64: 128, 128>}, {pipeline_mode = #tpu.pipeline_mode<synchronous>, transform_indices = @transform_7, window_bounds = array<i64: 1, 128>}, {pipeline_mode = #tpu.pipeline_mode<synchronous>, transform_indices = @transform_8, window_bounds = array<i64: 256, 128>}, {pipeline_mode = #tpu.pipeline_mode<synchronous>, transform_indices = @transform_9, window_bounds = array<i64: 1, 128>}, {transform_indices = @transform_10, window_bounds = array<i64: 16, 128>}]} {
    %c0_i32 = arith.constant 0 : i32
    %0 = arith.cmpi eq, %arg1, %c0_i32 : i32
    %1 = arith.extui %0 : i1 to i32
    %c0_i32_0 = arith.constant 0 : i32
    %2 = arith.cmpi ne, %1, %c0_i32_0 : i32
    scf.if %2 {
      %cst_10 = arith.constant 0.000000e+00 : f32
      %12 = vector.broadcast %cst_10 : f32 to vector<16x128xf32>
      %c0_11 = arith.constant 0 : index
      %c0_12 = arith.constant 0 : index
      %13 = vector.load %arg13[%c0_11, %c0_12] : memref<16x128xf32, #tpu.memory_space<vmem>>, vector<16x128xf32>
      tpu.vector_store %arg13[%c0_11, %c0_12], %12 {strides = array<i32>} : memref<16x128xf32, #tpu.memory_space<vmem>>, vector<16x128xf32>,
    } else {
    }
    %c0 = arith.constant 0 : index
    %c0_1 = arith.constant 0 : index
    %3 = vector.load %arg13[%c0, %c0_1] : memref<16x128xf32, #tpu.memory_space<vmem>>, vector<16x128xf32>
    %c0_2 = arith.constant 0 : index
    %c0_3 = arith.constant 0 : index
    %4 = vector.load %arg2[%c0_2, %c0_3] : memref<16x128xf32, #tpu.memory_space<vmem>>, vector<16x128xf32>
    %c0_4 = arith.constant 0 : index
    %c0_5 = arith.constant 0 : index
    %5 = vector.load %arg4[%c0_4, %c0_5] : memref<128x128xf32, #tpu.memory_space<vmem>>, vector<128x128xf32>
    %cst = arith.constant dense<0.000000e+00> : vector<16x128xf32>
    %6 = tpu.matmul %4, %5, %cst {dimension_numbers = #tpu.dot_dimension_numbers<[1], [0], [0], [1], [0, 0, 1, 1], [], []>} : vector<16x128xf32>, vector<128x128xf32>, vector<16x128xf32> -> vector<16x128xf32>
    %7 = arith.addf %3, %6 : vector<16x128xf32>
    %c0_6 = arith.constant 0 : index
    %c0_7 = arith.constant 0 : index
    %8 = vector.load %arg13[%c0_6, %c0_7] : memref<16x128xf32, #tpu.memory_space<vmem>>, vector<16x128xf32>
    tpu.vector_store %arg13[%c0_6, %c0_7], %7 {strides = array<i32>} : memref<16x128xf32, #tpu.memory_space<vmem>>, vector<16x128xf32>,
    %c0_i32_8 = arith.constant 0 : i32
    %9 = arith.cmpi eq, %arg1, %c0_i32_8 : i32
    %10 = arith.extui %9 : i1 to i32
    %c0_i32_9 = arith.constant 0 : i32
    %11 = arith.cmpi ne, %10, %c0_i32_9 : i32
    scf.if %11 {
      %c0_10 = arith.constant 0 : index
      %c0_11 = arith.constant 0 : index
      %12 = vector.load %arg13[%c0_10, %c0_11] : memref<16x128xf32, #tpu.memory_space<vmem>>, vector<16x128xf32>
      %c0_12 = arith.constant 0 : index
      %c0_13 = arith.constant 0 : index
      %13 = vector.load %arg5[%c0_12, %c0_13] : memref<1x128xf32, #tpu.memory_space<vmem>>, vector<1x128xf32>
      %14 = vector.broadcast %13 : vector<1x128xf32> to vector<16x128xf32>
      %15 = arith.addf %12, %14 : vector<16x128xf32>
      %cst_14 = arith.constant 0.000000e+00 : f32
      %16 = vector.broadcast %cst_14 : f32 to vector<16x128xf32>
      %17 = arith.maximumf %15, %16 : vector<16x128xf32>
      %c0_15 = arith.constant 0 : index
      %c0_16 = arith.constant 0 : index
      %18 = vector.load %arg6[%c0_15, %c0_16] : memref<128x128xf32, #tpu.memory_space<vmem>>, vector<128x128xf32>
      %cst_17 = arith.constant dense<0.000000e+00> : vector<16x128xf32>
      %19 = tpu.matmul %17, %18, %cst_17 {dimension_numbers = #tpu.dot_dimension_numbers<[1], [0], [0], [1], [0, 0, 1, 1], [], []>} : vector<16x128xf32>, vector<128x128xf32>, vector<16x128xf32> -> vector<16x128xf32>
      %c0_18 = arith.constant 0 : index
      %c0_19 = arith.constant 0 : index
      %20 = vector.load %arg7[%c0_18, %c0_19] : memref<1x128xf32, #tpu.memory_space<vmem>>, vector<1x128xf32>
      %21 = vector.broadcast %20 : vector<1x128xf32> to vector<16x128xf32>
      %22 = arith.addf %19, %21 : vector<16x128xf32>
      %cst_20 = arith.constant 0.000000e+00 : f32
      %23 = vector.broadcast %cst_20 : f32 to vector<16x128xf32>
      %24 = arith.maximumf %22, %23 : vector<16x128xf32>
      %c0_21 = arith.constant 0 : index
      %c0_22 = arith.constant 0 : index
      %25 = vector.load %arg3[%c0_21, %c0_22] : memref<16x128xf32, #tpu.memory_space<vmem>>, vector<16x128xf32>
      %c0_23 = arith.constant 0 : index
      %c0_24 = arith.constant 0 : index
      %26 = vector.load %arg8[%c0_23, %c0_24] : memref<128x128xf32, #tpu.memory_space<vmem>>, vector<128x128xf32>
      %cst_25 = arith.constant dense<0.000000e+00> : vector<16x128xf32>
      %27 = tpu.matmul %25, %26, %cst_25 {dimension_numbers = #tpu.dot_dimension_numbers<[1], [0], [0], [1], [0, 0, 1, 1], [], []>} : vector<16x128xf32>, vector<128x128xf32>, vector<16x128xf32> -> vector<16x128xf32>
      %c0_26 = arith.constant 0 : index
      %c0_27 = arith.constant 0 : index
      %28 = vector.load %arg9[%c0_26, %c0_27] : memref<1x128xf32, #tpu.memory_space<vmem>>, vector<1x128xf32>
      %29 = vector.broadcast %28 : vector<1x128xf32> to vector<16x128xf32>
      %30 = arith.addf %27, %29 : vector<16x128xf32>
      %cst_28 = arith.constant 0.000000e+00 : f32
      %31 = vector.broadcast %cst_28 : f32 to vector<16x128xf32>
      %32 = arith.maximumf %30, %31 : vector<16x128xf32>
      %c0_29 = arith.constant 0 : index
      %c0_30 = arith.constant 0 : index
      %33 = vector.load %arg14[%c0_29, %c0_30] : memref<16x256xf32, #tpu.memory_space<vmem>>, vector<16x128xf32>
      tpu.vector_store %arg14[%c0_29, %c0_30], %24 {strides = array<i32>} : memref<16x256xf32, #tpu.memory_space<vmem>>, vector<16x128xf32>,
      %c0_31 = arith.constant 0 : index
      %c128 = arith.constant 128 : index
      %34 = vector.load %arg14[%c0_31, %c128] : memref<16x256xf32, #tpu.memory_space<vmem>>, vector<16x128xf32>
      tpu.vector_store %arg14[%c0_31, %c128], %32 {strides = array<i32>} : memref<16x256xf32, #tpu.memory_space<vmem>>, vector<16x128xf32>,
      %c0_32 = arith.constant 0 : index
      %c0_33 = arith.constant 0 : index
      %35 = vector.load %arg14[%c0_32, %c0_33] : memref<16x256xf32, #tpu.memory_space<vmem>>, vector<16x256xf32>
      %c0_34 = arith.constant 0 : index
      %c0_35 = arith.constant 0 : index
      %36 = vector.load %arg10[%c0_34, %c0_35] : memref<256x128xf32, #tpu.memory_space<vmem>>, vector<256x128xf32>
      %cst_36 = arith.constant dense<0.000000e+00> : vector<16x128xf32>
      %37 = tpu.matmul %35, %36, %cst_36 {dimension_numbers = #tpu.dot_dimension_numbers<[1], [0], [0], [1], [0, 0, 1, 1], [], []>} : vector<16x256xf32>, vector<256x128xf32>, vector<16x128xf32> -> vector<16x128xf32>
      %c0_37 = arith.constant 0 : index
      %c0_38 = arith.constant 0 : index
      %38 = vector.load %arg11[%c0_37, %c0_38] : memref<1x128xf32, #tpu.memory_space<vmem>>, vector<1x128xf32>
      %39 = vector.broadcast %38 : vector<1x128xf32> to vector<16x128xf32>
      %40 = arith.addf %37, %39 : vector<16x128xf32>
      %41 = tpu.iota {dimensions = array<i32: 1>} : vector<16x128xi32>
      %c4_i32 = arith.constant 4 : i32
      %42 = vector.broadcast %c4_i32 : i32 to vector<16x128xi32>
      %43 = arith.cmpi slt, %41, %42 : vector<16x128xi32>
      %cst_39 = arith.constant -1.000000e+30 : f32
      %44 = vector.broadcast %cst_39 : f32 to vector<16x128xf32>
      %45 = arith.select %43, %40, %44 : vector<16x128xi1>, vector<16x128xf32>
      %cst_40 = arith.constant dense<0xFF800000> : vector<16xf32>
      %46 = vector.multi_reduction <maximumf>, %45, %cst_40 [1] : vector<16x128xf32> to vector<16xf32>
      %47 = vector.shape_cast %46 : vector<16xf32> to vector<16x1xf32>
      %48 = vector.broadcast %47 : vector<16x1xf32> to vector<16x128xf32>
      %49 = arith.subf %45, %48 : vector<16x128xf32>
      %50 = math.exp %49 : vector<16x128xf32>
      %cst_41 = arith.constant dense<0.000000e+00> : vector<16xf32>
      %51 = vector.multi_reduction <add>, %50, %cst_41 [1] : vector<16x128xf32> to vector<16xf32>
      %52 = vector.shape_cast %51 : vector<16xf32> to vector<16x1xf32>
      %53 = math.log %52 : vector<16x1xf32>
      %54 = arith.addf %47, %53 : vector<16x1xf32>
      %55 = vector.broadcast %54 : vector<16x1xf32> to vector<16x128xf32>
      %56 = arith.subf %45, %55 : vector<16x128xf32>
      %c0_42 = arith.constant 0 : index
      %c0_43 = arith.constant 0 : index
      %57 = vector.load %arg12[%c0_42, %c0_43] : memref<16x128xf32, #tpu.memory_space<vmem>>, vector<16x128xf32>
      tpu.vector_store %arg12[%c0_42, %c0_43], %56 {strides = array<i32>} : memref<16x128xf32, #tpu.memory_space<vmem>>, vector<16x128xf32>,
    } else {
    }
    return
  }
  func.func @transform_0(%arg0: i32, %arg1: i32) -> (i32, i32) {
    %c0_i32 = arith.constant 0 : i32
    return %arg0, %arg1 : i32, i32
  }
  func.func @transform_1(%arg0: i32, %arg1: i32) -> (i32, i32) {
    %c0_i32 = arith.constant 0 : i32
    %c0_i32_0 = arith.constant 0 : i32
    return %arg0, %c0_i32 : i32, i32
  }
  func.func @transform_2(%arg0: i32, %arg1: i32) -> (i32, i32) {
    %c0_i32 = arith.constant 0 : i32
    %c0_i32_0 = arith.constant 0 : i32
    return %arg1, %c0_i32 : i32, i32
  }
  func.func @transform_3(%arg0: i32, %arg1: i32) -> (i32, i32) {
    %c0_i32 = arith.constant 0 : i32
    %c0_i32_0 = arith.constant 0 : i32
    %c0_i32_1 = arith.constant 0 : i32
    return %c0_i32, %c0_i32_0 : i32, i32
  }
  func.func @transform_4(%arg0: i32, %arg1: i32) -> (i32, i32) {
    %c0_i32 = arith.constant 0 : i32
    %c0_i32_0 = arith.constant 0 : i32
    %c0_i32_1 = arith.constant 0 : i32
    return %c0_i32, %c0_i32_0 : i32, i32
  }
  func.func @transform_5(%arg0: i32, %arg1: i32) -> (i32, i32) {
    %c0_i32 = arith.constant 0 : i32
    %c0_i32_0 = arith.constant 0 : i32
    %c0_i32_1 = arith.constant 0 : i32
    return %c0_i32, %c0_i32_0 : i32, i32
  }
  func.func @transform_6(%arg0: i32, %arg1: i32) -> (i32, i32) {
    %c0_i32 = arith.constant 0 : i32
    %c0_i32_0 = arith.constant 0 : i32
    %c0_i32_1 = arith.constant 0 : i32
    return %c0_i32, %c0_i32_0 : i32, i32
  }
  func.func @transform_7(%arg0: i32, %arg1: i32) -> (i32, i32) {
    %c0_i32 = arith.constant 0 : i32
    %c0_i32_0 = arith.constant 0 : i32
    %c0_i32_1 = arith.constant 0 : i32
    return %c0_i32, %c0_i32_0 : i32, i32
  }
  func.func @transform_8(%arg0: i32, %arg1: i32) -> (i32, i32) {
    %c0_i32 = arith.constant 0 : i32
    %c0_i32_0 = arith.constant 0 : i32
    %c0_i32_1 = arith.constant 0 : i32
    return %c0_i32, %c0_i32_0 : i32, i32
  }
  func.func @transform_9(%arg0: i32, %arg1: i32) -> (i32, i32) {
    %c0_i32 = arith.constant 0 : i32
    %c0_i32_0 = arith.constant 0 : i32
    %c0_i32_1 = arith.constant 0 : i32
    return %c0_i32, %c0_i32_0 : i32, i32
  }
  func.func @transform_10(%arg0: i32, %arg1: i32) -> (i32, i32) {
    %c0_i32 = arith.constant 0 : i32
    %c0_i32_0 = arith.constant 0 : i32
    return %arg0, %c0_i32 : i32, i32
  }
}

</mosaic_0001>

<llo_original>
// kernel: tpu_custom_call.1
$region0: #{tpu_custom_call.1}
  #allocation0 [shape = 'u32[]', space=smem, size = 0x4, offset = 0x4, fixed_abs, tag = 'smem constant byte address 0x4 - core index']
  #allocation1 [shape = 'u32[144,128]{1,0:T(1,128)}', space=vmem, size = 0x12000, scoped, tag = 'internal scratch']
  #allocation2 [shape = 'f32[16,128]{1,0:T(8,128)}', space=vmem, size = 0x2000, scoped, tag = 'scratch operand']
  #allocation3 [shape = 'f32[16,256]{1,0:T(8,128)}', space=vmem, size = 0x4000, scoped, tag = 'scratch operand']
  %s0 = inlined_call_operand.hbm [shape: f32[16,128], index: 0, kind: input, shape index: {}]
  %s1 = inlined_call_operand.hbm [shape: f32[16,128], index: 1, kind: input, shape index: {}]
  %s2 = inlined_call_operand.hbm [shape: f32[128,128], index: 2, kind: input, shape index: {}]
  %s3 = inlined_call_operand.vmem [shape: f32[1,128], index: 3, kind: input, shape index: {}]
  %s4 = inlined_call_operand.hbm [shape: f32[128,128], index: 4, kind: input, shape index: {}]
  %s5 = inlined_call_operand.vmem [shape: f32[1,128], index: 5, kind: input, shape index: {}]
  %s6 = inlined_call_operand.hbm [shape: f32[128,128], index: 6, kind: input, shape index: {}]
  %s7 = inlined_call_operand.vmem [shape: f32[1,128], index: 7, kind: input, shape index: {}]
  %s8 = inlined_call_operand.hbm [shape: f32[256,128], index: 8, kind: input, shape index: {}]
  %s9 = inlined_call_operand.vmem [shape: f32[1,128], index: 9, kind: input, shape index: {}]
  %s10 = inlined_call_operand.hbm [shape: f32[16,128], index: 10, kind: output, shape index: {}]
  %s11 = sld [smem:[#allocation0]]
  $region82: #{tpu_custom_call.1} parent=0
    _
  %s13 = ssub.s32 1, %s11
  %s14 = scalar_select 0, %s13, %s11
  $region1: #{tpu_custom_call.1} parent=0
    #allocation4 [shape = 'u8[8192]{0}', space=vmem, size = 0x2000, scoped, tag = 'input window, operand 0, single buffered']
    #allocation5 [shape = 's32[1]{0}', space=sflag, size = 0x4, scoped, tag = 'scoped memory for tpu_custom_call.1']
    #allocation6 [shape = 's32[1]{0}', space=sflag, size = 0x4, scoped, tag = 'scoped memory for tpu_custom_call.1']
    #allocation7 [shape = 'u8[8192]{0}', space=vmem, size = 0x2000, scoped, tag = 'input window, operand 1, single buffered']
    #allocation8 [shape = 's32[1]{0}', space=sflag, size = 0x4, scoped, tag = 'scoped memory for tpu_custom_call.1']
    #allocation9 [shape = 'u8[65536]{0}', space=vmem, size = 0x10000, scoped, tag = 'input window, operand 2, single buffered']
    #allocation10 [shape = 'u8[65536]{0}', space=vmem, size = 0x10000, scoped, tag = 'input window, operand 4, single buffered']
    #allocation11 [shape = 's32[1]{0}', space=sflag, size = 0x4, scoped, tag = 'scoped memory for tpu_custom_call.1']
    #allocation12 [shape = 'u8[65536]{0}', space=vmem, size = 0x10000, scoped, tag = 'input window, operand 6, single buffered']
    #allocation13 [shape = 'u8[131072]{0}', space=vmem, size = 0x20000, scoped, tag = 'input window, operand 8, single buffered']
    #allocation14 [shape = 's32[1]{0}', space=sflag, size = 0x4, scoped, tag = 'scoped memory for tpu_custom_call.1']
    #allocation15 [shape = 'u8[8192]{0}', space=vmem, size = 0x2000, scoped, tag = 'output window, operand 0, single buffered']
    %15 = vsyncpa [#allocation5], 0
    %16 = vsyncpa [#allocation8], 0
    %17 = vsyncpa [#allocation11], 0
    %18 = vsyncpa [#allocation14], 0
    %19 = vsyncpa [#allocation6], 0
    // Predicated region
    $region2: #{tpu_custom_call.1} parent=1 // pred_check
      _
    $region3: #{tpu_custom_call.1} parent=1 // pred_check_branch
      %21 = sbr.rel (0) target = $region5
    $region4: #{tpu_custom_call.1} parent=1 // pred_region
      %s23 = ssub.s32 256, 256
      %24 = vsyncadd [#allocation5], %s23
      %s25 = sshll.u32 [#allocation4], 4
      %s26 = int_to_ptr.vmem [resolvable:$true] %s25
      %31 = dma.hbm_to_vmem [thread:$0]  %s0, 256, %s26, [#allocation5], 128, 128, 8
    $region5: #{tpu_custom_call.1} parent=1 // pred_fallthru
      _
    // Predicated region
    $region6: #{tpu_custom_call.1} parent=1 // pred_check
      _
    $region7: #{tpu_custom_call.1} parent=1 // pred_check_branch
      %33 = sbr.rel (0) target = $region9
    $region8: #{tpu_custom_call.1} parent=1 // pred_region
      %s35 = ssub.s32 256, 256
      %36 = vsyncadd [#allocation8], %s35
      %s37 = sshll.u32 [#allocation7], 4
      %s38 = int_to_ptr.vmem [resolvable:$true] %s37
      %43 = dma.hbm_to_vmem [thread:$0]  %s1, 256, %s38, [#allocation8], 128, 128, 8
    $region9: #{tpu_custom_call.1} parent=1 // pred_fallthru
      _
    // Predicated region
    $region10: #{tpu_custom_call.1} parent=1 // pred_check
      _
    $region11: #{tpu_custom_call.1} parent=1 // pred_check_branch
      %45 = sbr.rel (0) target = $region13
    $region12: #{tpu_custom_call.1} parent=1 // pred_region
      %s47 = ssub.s32 2048, 2048
      %48 = vsyncadd [#allocation8], %s47
      %s49 = sshll.u32 [#allocation9], 4
      %s50 = int_to_ptr.vmem [resolvable:$true] %s49
      %55 = dma.hbm_to_vmem [thread:$0]  %s2, 2048, %s50, [#allocation8], 128, 128, 8
    $region13: #{tpu_custom_call.1} parent=1 // pred_fallthru
      _
    // Predicated region
    $region14: #{tpu_custom_call.1} parent=1 // pred_check
      _
    $region15: #{tpu_custom_call.1} parent=1 // pred_check_branch
      %57 = sbr.rel (0) target = $region17
    $region16: #{tpu_custom_call.1} parent=1 // pred_region
      _
    $region17: #{tpu_custom_call.1} parent=1 // pred_fallthru
      _
    // Predicated region
    $region18: #{tpu_custom_call.1} parent=1 // pred_check
      _
    $region19: #{tpu_custom_call.1} parent=1 // pred_check_branch
      %59 = sbr.rel (0) target = $region21
    $region20: #{tpu_custom_call.1} parent=1 // pred_region
      %s61 = ssub.s32 2048, 2048
      %62 = vsyncadd [#allocation11], %s61
      %s63 = sshll.u32 [#allocation10], 4
      %s64 = int_to_ptr.vmem [resolvable:$true] %s63
      %69 = dma.hbm_to_vmem [thread:$0]  %s4, 2048, %s64, [#allocation11], 128, 128, 8
    $region21: #{tpu_custom_call.1} parent=1 // pred_fallthru
      _
    // Predicated region
    $region22: #{tpu_custom_call.1} parent=1 // pred_check
      _
    $region23: #{tpu_custom_call.1} parent=1 // pred_check_branch
      %71 = sbr.rel (0) target = $region25
    $region24: #{tpu_custom_call.1} parent=1 // pred_region
      _
    $region25: #{tpu_custom_call.1} parent=1 // pred_fallthru
      _
    // Predicated region
    $region26: #{tpu_custom_call.1} parent=1 // pred_check
      _
    $region27: #{tpu_custom_call.1} parent=1 // pred_check_branch
      %73 = sbr.rel (0) target = $region29
    $region28: #{tpu_custom_call.1} parent=1 // pred_region
      %s75 = ssub.s32 2048, 2048
      %76 = vsyncadd [#allocation11], %s75
      %s77 = sshll.u32 [#allocation12], 4
      %s78 = int_to_ptr.vmem [resolvable:$true] %s77
      %83 = dma.hbm_to_vmem [thread:$0]  %s6, 2048, %s78, [#allocation11], 128, 128, 8
    $region29: #{tpu_custom_call.1} parent=1 // pred_fallthru
      _
    // Predicated region
    $region30: #{tpu_custom_call.1} parent=1 // pred_check
      _
    $region31: #{tpu_custom_call.1} parent=1 // pred_check_branch
      %85 = sbr.rel (0) target = $region33
    $region32: #{tpu_custom_call.1} parent=1 // pred_region
      _
    $region33: #{tpu_custom_call.1} parent=1 // pred_fallthru
      _
    // Predicated region
    $region34: #{tpu_custom_call.1} parent=1 // pred_check
      _
    $region35: #{tpu_custom_call.1} parent=1 // pred_check_branch
      %87 = sbr.rel (0) target = $region37
    $region36: #{tpu_custom_call.1} parent=1 // pred_region
      %s89 = ssub.s32 4096, 4096
      %90 = vsyncadd [#allocation14], %s89
      %s91 = sshll.u32 [#allocation13], 4
      %s92 = int_to_ptr.vmem [resolvable:$true] %s91
      %97 = dma.hbm_to_vmem [thread:$0]  %s8, 4096, %s92, [#allocation14], 128, 128, 8
    $region37: #{tpu_custom_call.1} parent=1 // pred_fallthru
      _
    // Predicated region
    $region38: #{tpu_custom_call.1} parent=1 // pred_check
      _
    $region39: #{tpu_custom_call.1} parent=1 // pred_check_branch
      %99 = sbr.rel (0) target = $region41
    $region40: #{tpu_custom_call.1} parent=1 // pred_region
      _
    $region41: #{tpu_custom_call.1} parent=1 // pred_fallthru
      _
    // Predicated region
    $region42: #{tpu_custom_call.1} parent=1 // pred_check
      _
    $region43: #{tpu_custom_call.1} parent=1 // pred_check_branch
      %101 = sbr.rel (0) target = $region45
    $region44: #{tpu_custom_call.1} parent=1 // pred_region
      %102 = dma.done [#allocation5], 256
    $region45: #{tpu_custom_call.1} parent=1 // pred_fallthru
      _
    // Predicated region
    $region46: #{tpu_custom_call.1} parent=1 // pred_check
      _
    $region47: #{tpu_custom_call.1} parent=1 // pred_check_branch
      %104 = sbr.rel (0) target = $region49
    $region48: #{tpu_custom_call.1} parent=1 // pred_region
      %105 = dma.done [#allocation8], 256
    $region49: #{tpu_custom_call.1} parent=1 // pred_fallthru
      _
    // Predicated region
    $region50: #{tpu_custom_call.1} parent=1 // pred_check
      _
    $region51: #{tpu_custom_call.1} parent=1 // pred_check_branch
      %107 = sbr.rel (0) target = $region53
    $region52: #{tpu_custom_call.1} parent=1 // pred_region
      %108 = dma.done [#allocation8], 2048
    $region53: #{tpu_custom_call.1} parent=1 // pred_fallthru
      _
    // Predicated region
    $region54: #{tpu_custom_call.1} parent=1 // pred_check
      _
    $region55: #{tpu_custom_call.1} parent=1 // pred_check_branch
      %110 = sbr.rel (0) target = $region57
    $region56: #{tpu_custom_call.1} parent=1 // pred_region
      %111 = dma.done [#allocation11], 2048
    $region57: #{tpu_custom_call.1} parent=1 // pred_fallthru
      _
    // Predicated region
    $region58: #{tpu_custom_call.1} parent=1 // pred_check
      _
    $region59: #{tpu_custom_call.1} parent=1 // pred_check_branch
      %113 = sbr.rel (0) target = $region61
    $region60: #{tpu_custom_call.1} parent=1 // pred_region
      %114 = dma.done [#allocation11], 2048
    $region61: #{tpu_custom_call.1} parent=1 // pred_fallthru
      _
    // Predicated region
    $region62: #{tpu_custom_call.1} parent=1 // pred_check
      _
    $region63: #{tpu_custom_call.1} parent=1 // pred_check_branch
      %116 = sbr.rel (0) target = $region65
    $region64: #{tpu_custom_call.1} parent=1 // pred_region
      %117 = dma.done [#allocation14], 4096
    $region65: #{tpu_custom_call.1} parent=1 // pred_fallthru
      _
    %p118 = scmp.eq.s32.totalorder 0, 0
    // Predicated region
    $region66: #{tpu_custom_call.1} parent=1 // pred_check
      %p119 = pneg %p118
    $region67: #{tpu_custom_call.1} parent=1 // pred_check_branch
      %121 = sbr.rel (%p119) target = $region69
    $region68: #{tpu_custom_call.1} parent=1 // pred_region
      %122 = vst [vmem:[#allocation2] sm:$0xff] 0.0
      %123 = vst [vmem:[#allocation2 + $0x8] sm:$0xff] 0.0
    $region69: #{tpu_custom_call.1} parent=1 // pred_fallthru
      _
    %v124 = vld [vmem:[#allocation2] sm:$0xff]
    %v125 = vld [vmem:[#allocation2 + $0x8] sm:$0xff]
    %v126 = vld [vmem:[#allocation4] sm:$0xff]
    %v127 = vld [vmem:[#allocation4 + $0x8] sm:$0xff]
    %v128 = vld [vmem:[#allocation9] sm:$0xff]
    %v129 = vld [vmem:[#allocation9 + $0x8] sm:$0xff]
    %v130 = vld [vmem:[#allocation9 + $0x10] sm:$0xff]
    %v131 = vld [vmem:[#allocation9 + $0x18] sm:$0xff]
    %v132 = vld [vmem:[#allocation9 + $0x20] sm:$0xff]
    %v133 = vld [vmem:[#allocation9 + $0x28] sm:$0xff]
    %v134 = vld [vmem:[#allocation9 + $0x30] sm:$0xff]
    %v135 = vld [vmem:[#allocation9 + $0x38] sm:$0xff]
    %v136 = vld [vmem:[#allocation9 + $0x40] sm:$0xff]
    %v137 = vld [vmem:[#allocation9 + $0x48] sm:$0xff]
    %v138 = vld [vmem:[#allocation9 + $0x50] sm:$0xff]
    %v139 = vld [vmem:[#allocation9 + $0x58] sm:$0xff]
    %v140 = vld [vmem:[#allocation9 + $0x60] sm:$0xff]
    %v141 = vld [vmem:[#allocation9 + $0x68] sm:$0xff]
    %v142 = vld [vmem:[#allocation9 + $0x70] sm:$0xff]
    %v143 = vld [vmem:[#allocation9 + $0x78] sm:$0xff]
    %144 = vmatprep.subr.mxu0 0.0
    %145 = vmatpush1.msra.mxu0 %v128
    %146 = vmatprep.subr.mxu0 0.0
    %147 = vmatpush1.msra.mxu0 %v129
    %148 = vmatprep.subr.mxu0 0.0
    %149 = vmatpush1.msra.mxu0 %v130
    %150 = vmatprep.subr.mxu0 0.0
    %151 = vmatpush1.msra.mxu0 %v131
    %152 = vmatprep.subr.mxu0 0.0
    %153 = vmatpush1.msra.mxu0 %v132
    %154 = vmatprep.subr.mxu0 0.0
    %155 = vmatpush1.msra.mxu0 %v133
    %156 = vmatprep.subr.mxu0 0.0
    %157 = vmatpush1.msra.mxu0 %v134
    %158 = vmatprep.subr.mxu0 0.0
    %159 = vmatpush1.msra.mxu0 %v135
    %160 = vmatprep.subr.mxu0 0.0
    %161 = vmatpush1.msra.mxu0 %v136
    %162 = vmatprep.subr.mxu0 0.0
    %163 = vmatpush1.msra.mxu0 %v137
    %164 = vmatprep.subr.mxu0 0.0
    %165 = vmatpush1.msra.mxu0 %v138
    %166 = vmatprep.subr.mxu0 0.0
    %167 = vmatpush1.msra.mxu0 %v139
    %168 = vmatprep.subr.mxu0 0.0
    %169 = vmatpush1.msra.mxu0 %v140
    %170 = vmatprep.subr.mxu0 0.0
    %171 = vmatpush1.msra.mxu0 %v141
    %172 = vmatprep.subr.mxu0 0.0
    %173 = vmatpush1.msra.mxu0 %v142
    %174 = vmatprep.subr.mxu0 0.0
    %175 = vmatpush1.msra.mxu0 %v143
    %176 = vmatprep.subr.mxu0 0.0
    %177 = vmatpush1.msra.mxu0 0.0
    %178 = vmatprep.subr.mxu0 0.0
    %179 = vmatpush1.msra.mxu0 0.0
    %180 = vmatprep.subr.mxu0 0.0
    %181 = vmatpush1.msra.mxu0 0.0
    %182 = vmatprep.subr.mxu0 0.0
    %183 = vmatpush1.msra.mxu0 0.0
    %184 = vmatprep.subr.mxu0 0.0
    %185 = vmatpush1.msra.mxu0 0.0
    %186 = vmatprep.subr.mxu0 0.0
    %187 = vmatpush1.msra.mxu0 0.0
    %188 = vmatprep.subr.mxu0 0.0
    %189 = vmatpush1.msra.mxu0 0.0
    %190 = vmatprep.subr.mxu0 0.0
    %191 = vmatpush1.msra.mxu0 0.0
    %192 = vmatprep.subr.mxu0 0.0
    %193 = vmatpush1.msra.mxu0 0.0
    %194 = vmatprep.subr.mxu0 0.0
    %195 = vmatpush1.msra.mxu0 0.0
    %196 = vmatprep.subr.mxu0 0.0
    %197 = vmatpush1.msra.mxu0 0.0
    %198 = vmatprep.subr.mxu0 0.0
    %199 = vmatpush1.msra.mxu0 0.0
    %200 = vmatprep.subr.mxu0 0.0
    %201 = vmatpush1.msra.mxu0 0.0
    %202 = vmatprep.subr.mxu0 0.0
    %203 = vmatpush1.msra.mxu0 0.0
    %204 = vmatprep.subr.mxu0 0.0
    %205 = vmatpush1.msra.mxu0 0.0
    %206 = vmatprep.subr.mxu0 0.0
    %207 = vmatpush1.msra.mxu0 0.0
    %208 = vmatprep.mubr.f32.mxu0 0.0
    %209 = vmatmul.mubr.f32.gmra.mrb[0].mxu0 %v126
    %v210 = vpop.f32.mrb[0].mxu0
    %v211 = vadd.f32 0.0, %v210
    %v212 = vpop.f32.mrb[0].mxu0
    %213 = vmatprep.mubr.f32.mxu0 0.0
    %214 = vmatmul.mubr.f32.gmra.mrb[0].mxu0 %v127
    %v215 = vpop.f32.mrb[0].mxu0
    %v216 = vadd.f32 0.0, %v215
    %v217 = vpop.f32.mrb[0].mxu0
    %218 = vdwg.mxu0
    %v219 = vadd.f32 %v124, %v211
    %v220 = vadd.f32 %v125, %v216
    %221 = vst [vmem:[#allocation2] sm:$0xff] %v219
    %222 = vst [vmem:[#allocation2 + $0x8] sm:$0xff] %v220
    // Predicated region
    $region70: #{tpu_custom_call.1} parent=1 // pred_check
      %p223 = pneg %p118
    $region71: #{tpu_custom_call.1} parent=1 // pred_check_branch
      %225 = sbr.rel (%p223) target = $region73
    $region72: #{tpu_custom_call.1} parent=1 // pred_region
      %v226 = vld [vmem:[#allocation2] sm:$0xff]
      %v227 = vld [vmem:[#allocation2 + $0x8] sm:$0xff]
      %v228 = vld [vmem:[%s3] sm:$0x1]
      %v230 = vlaneseq
      %v231 = vshrl.u32 %v230, 7
      %v232 = vsub.s32 0, %v231
      %v233 = vrot.slane %v228, %v232
      %v235 = vadd.f32 %v226, %v233
      %v236 = vadd.f32 %v227, %v233
      %v237 = vmax.f32 %v235, 0.0
      %v238 = vmax.f32 %v236, 0.0
      %v239 = vld [vmem:[#allocation10] sm:$0xff]
      %v240 = vld [vmem:[#allocation10 + $0x8] sm:$0xff]
      %v241 = vld [vmem:[#allocation10 + $0x10] sm:$0xff]
      %v242 = vld [vmem:[#allocation10 + $0x18] sm:$0xff]
      %v243 = vld [vmem:[#allocation10 + $0x20] sm:$0xff]
      %v244 = vld [vmem:[#allocation10 + $0x28] sm:$0xff]
      %v245 = vld [vmem:[#allocation10 + $0x30] sm:$0xff]
      %v246 = vld [vmem:[#allocation10 + $0x38] sm:$0xff]
      %v247 = vld [vmem:[#allocation10 + $0x40] sm:$0xff]
      %v248 = vld [vmem:[#allocation10 + $0x48] sm:$0xff]
      %v249 = vld [vmem:[#allocation10 + $0x50] sm:$0xff]
      %v250 = vld [vmem:[#allocation10 + $0x58] sm:$0xff]
      %v251 = vld [vmem:[#allocation10 + $0x60] sm:$0xff]
      %v252 = vld [vmem:[#allocation10 + $0x68] sm:$0xff]
      %v253 = vld [vmem:[#allocation10 + $0x70] sm:$0xff]
      %v254 = vld [vmem:[#allocation10 + $0x78] sm:$0xff]
      %v255 = vld [vmem:[%s5] sm:$0x1]
      %v257 = vlaneseq
      %v258 = vshrl.u32 %v257, 7
      %v259 = vsub.s32 0, %v258
      %v260 = vrot.slane %v255, %v259
      %262 = vmatprep.subr.mxu0 0.0
      %263 = vmatpush1.msra.mxu0 %v239
      %264 = vmatprep.subr.mxu0 0.0
      %265 = vmatpush1.msra.mxu0 %v240
      %266 = vmatprep.subr.mxu0 0.0
      %267 = vmatpush1.msra.mxu0 %v241
      %268 = vmatprep.subr.mxu0 0.0
      %269 = vmatpush1.msra.mxu0 %v242
      %270 = vmatprep.subr.mxu0 0.0
      %271 = vmatpush1.msra.mxu0 %v243
      %272 = vmatprep.subr.mxu0 0.0
      %273 = vmatpush1.msra.mxu0 %v244
      %274 = vmatprep.subr.mxu0 0.0
      %275 = vmatpush1.msra.mxu0 %v245
      %276 = vmatprep.subr.mxu0 0.0
      %277 = vmatpush1.msra.mxu0 %v246
      %278 = vmatprep.subr.mxu0 0.0
      %279 = vmatpush1.msra.mxu0 %v247
      %280 = vmatprep.subr.mxu0 0.0
      %281 = vmatpush1.msra.mxu0 %v248
      %282 = vmatprep.subr.mxu0 0.0
      %283 = vmatpush1.msra.mxu0 %v249
      %284 = vmatprep.subr.mxu0 0.0
      %285 = vmatpush1.msra.mxu0 %v250
      %286 = vmatprep.subr.mxu0 0.0
      %287 = vmatpush1.msra.mxu0 %v251
      %288 = vmatprep.subr.mxu0 0.0
      %289 = vmatpush1.msra.mxu0 %v252
      %290 = vmatprep.subr.mxu0 0.0
      %291 = vmatpush1.msra.mxu0 %v253
      %292 = vmatprep.subr.mxu0 0.0
      %293 = vmatpush1.msra.mxu0 %v254
      %294 = vmatprep.subr.mxu0 0.0
      %295 = vmatpush1.msra.mxu0 0.0
      %296 = vmatprep.subr.mxu0 0.0
      %297 = vmatpush1.msra.mxu0 0.0
      %298 = vmatprep.subr.mxu0 0.0
      %299 = vmatpush1.msra.mxu0 0.0
      %300 = vmatprep.subr.mxu0 0.0
      %301 = vmatpush1.msra.mxu0 0.0
      %302 = vmatprep.subr.mxu0 0.0
      %303 = vmatpush1.msra.mxu0 0.0
      %304 = vmatprep.subr.mxu0 0.0
      %305 = vmatpush1.msra.mxu0 0.0
      %306 = vmatprep.subr.mxu0 0.0
      %307 = vmatpush1.msra.mxu0 0.0
      %308 = vmatprep.subr.mxu0 0.0
      %309 = vmatpush1.msra.mxu0 0.0
      %310 = vmatprep.subr.mxu0 0.0
      %311 = vmatpush1.msra.mxu0 0.0
      %312 = vmatprep.subr.mxu0 0.0
      %313 = vmatpush1.msra.mxu0 0.0
      %314 = vmatprep.subr.mxu0 0.0
      %315 = vmatpush1.msra.mxu0 0.0
      %316 = vmatprep.subr.mxu0 0.0
      %317 = vmatpush1.msra.mxu0 0.0
      %318 = vmatprep.subr.mxu0 0.0
      %319 = vmatpush1.msra.mxu0 0.0
      %320 = vmatprep.subr.mxu0 0.0
      %321 = vmatpush1.msra.mxu0 0.0
      %322 = vmatprep.subr.mxu0 0.0
      %323 = vmatpush1.msra.mxu0 0.0
      %324 = vmatprep.subr.mxu0 0.0
      %325 = vmatpush1.msra.mxu0 0.0
      %326 = vmatprep.mubr.f32.mxu0 0.0
      %327 = vmatmul.mubr.f32.gmra.mrb[0].mxu0 %v237
      %v328 = vpop.f32.mrb[0].mxu0
      %v329 = vadd.f32 %v260, %v328
      %v330 = vpop.f32.mrb[0].mxu0
      %331 = vmatprep.mubr.f32.mxu0 0.0
      %332 = vmatmul.mubr.f32.gmra.mrb[0].mxu0 %v238
      %v333 = vpop.f32.mrb[0].mxu0
      %v334 = vadd.f32 %v260, %v333
      %v335 = vpop.f32.mrb[0].mxu0
      %336 = vdwg.mxu0
      %v337 = vmax.f32 %v329, 0.0
      %v338 = vmax.f32 %v334, 0.0
      %v339 = vld [vmem:[#allocation7] sm:$0xff]
      %v340 = vld [vmem:[#allocation7 + $0x8] sm:$0xff]
      %v341 = vld [vmem:[#allocation12] sm:$0xff]
      %v342 = vld [vmem:[#allocation12 + $0x8] sm:$0xff]
      %v343 = vld [vmem:[#allocation12 + $0x10] sm:$0xff]
      %v344 = vld [vmem:[#allocation12 + $0x18] sm:$0xff]
      %v345 = vld [vmem:[#allocation12 + $0x20] sm:$0xff]
      %v346 = vld [vmem:[#allocation12 + $0x28] sm:$0xff]
      %v347 = vld [vmem:[#allocation12 + $0x30] sm:$0xff]
      %v348 = vld [vmem:[#allocation12 + $0x38] sm:$0xff]
      %v349 = vld [vmem:[#allocation12 + $0x40] sm:$0xff]
      %v350 = vld [vmem:[#allocation12 + $0x48] sm:$0xff]
      %v351 = vld [vmem:[#allocation12 + $0x50] sm:$0xff]
      %v352 = vld [vmem:[#allocation12 + $0x58] sm:$0xff]
      %v353 = vld [vmem:[#allocation12 + $0x60] sm:$0xff]
      %v354 = vld [vmem:[#allocation12 + $0x68] sm:$0xff]
      %v355 = vld [vmem:[#allocation12 + $0x70] sm:$0xff]
      %v356 = vld [vmem:[#allocation12 + $0x78] sm:$0xff]
      %v357 = vld [vmem:[%s7] sm:$0x1]
      %v359 = vlaneseq
      %v360 = vshrl.u32 %v359, 7
      %v361 = vsub.s32 0, %v360
      %v362 = vrot.slane %v357, %v361
      %364 = vmatprep.subr.mxu0 0.0
      %365 = vmatpush1.msra.mxu0 %v341
      %366 = vmatprep.subr.mxu0 0.0
      %367 = vmatpush1.msra.mxu0 %v342
      %368 = vmatprep.subr.mxu0 0.0
      %369 = vmatpush1.msra.mxu0 %v343
      %370 = vmatprep.subr.mxu0 0.0
      %371 = vmatpush1.msra.mxu0 %v344
      %372 = vmatprep.subr.mxu0 0.0
      %373 = vmatpush1.msra.mxu0 %v345
      %374 = vmatprep.subr.mxu0 0.0
      %375 = vmatpush1.msra.mxu0 %v346
      %376 = vmatprep.subr.mxu0 0.0
      %377 = vmatpush1.msra.mxu0 %v347
      %378 = vmatprep.subr.mxu0 0.0
      %379 = vmatpush1.msra.mxu0 %v348
      %380 = vmatprep.subr.mxu0 0.0
      %381 = vmatpush1.msra.mxu0 %v349
      %382 = vmatprep.subr.mxu0 0.0
      %383 = vmatpush1.msra.mxu0 %v350
      %384 = vmatprep.subr.mxu0 0.0
      %385 = vmatpush1.msra.mxu0 %v351
      %386 = vmatprep.subr.mxu0 0.0
      %387 = vmatpush1.msra.mxu0 %v352
      %388 = vmatprep.subr.mxu0 0.0
      %389 = vmatpush1.msra.mxu0 %v353
      %390 = vmatprep.subr.mxu0 0.0
      %391 = vmatpush1.msra.mxu0 %v354
      %392 = vmatprep.subr.mxu0 0.0
      %393 = vmatpush1.msra.mxu0 %v355
      %394 = vmatprep.subr.mxu0 0.0
      %395 = vmatpush1.msra.mxu0 %v356
      %396 = vmatprep.subr.mxu0 0.0
      %397 = vmatpush1.msra.mxu0 0.0
      %398 = vmatprep.subr.mxu0 0.0
      %399 = vmatpush1.msra.mxu0 0.0
      %400 = vmatprep.subr.mxu0 0.0
      %401 = vmatpush1.msra.mxu0 0.0
      %402 = vmatprep.subr.mxu0 0.0
      %403 = vmatpush1.msra.mxu0 0.0
      %404 = vmatprep.subr.mxu0 0.0
      %405 = vmatpush1.msra.mxu0 0.0
      %406 = vmatprep.subr.mxu0 0.0
      %407 = vmatpush1.msra.mxu0 0.0
      %408 = vmatprep.subr.mxu0 0.0
      %409 = vmatpush1.msra.mxu0 0.0
      %410 = vmatprep.subr.mxu0 0.0
      %411 = vmatpush1.msra.mxu0 0.0
      %412 = vmatprep.subr.mxu0 0.0
      %413 = vmatpush1.msra.mxu0 0.0
      %414 = vmatprep.subr.mxu0 0.0
      %415 = vmatpush1.msra.mxu0 0.0
      %416 = vmatprep.subr.mxu0 0.0
      %417 = vmatpush1.msra.mxu0 0.0
      %418 = vmatprep.subr.mxu0 0.0
      %419 = vmatpush1.msra.mxu0 0.0
      %420 = vmatprep.subr.mxu0 0.0
      %421 = vmatpush1.msra.mxu0 0.0
      %422 = vmatprep.subr.mxu0 0.0
      %423 = vmatpush1.msra.mxu0 0.0
      %424 = vmatprep.subr.mxu0 0.0
      %425 = vmatpush1.msra.mxu0 0.0
      %426 = vmatprep.subr.mxu0 0.0
      %427 = vmatpush1.msra.mxu0 0.0
      %428 = vmatprep.mubr.f32.mxu0 0.0
      %429 = vmatmul.mubr.f32.gmra.mrb[0].mxu0 %v339
      %v430 = vpop.f32.mrb[0].mxu0
      %v431 = vadd.f32 %v362, %v430
      %v432 = vpop.f32.mrb[0].mxu0
      %433 = vmatprep.mubr.f32.mxu0 0.0
      %434 = vmatmul.mubr.f32.gmra.mrb[0].mxu0 %v340
      %v435 = vpop.f32.mrb[0].mxu0
      %v436 = vadd.f32 %v362, %v435
      %v437 = vpop.f32.mrb[0].mxu0
      %438 = vdwg.mxu0
      %v439 = vmax.f32 %v431, 0.0
      %v440 = vmax.f32 %v436, 0.0
      %441 = vst [vmem:[#allocation3] sm:$0xff] %v337
      %442 = vst [vmem:[#allocation3 + $0x10] sm:$0xff] %v338
      %443 = vst [vmem:[#allocation3 + $0x8] sm:$0xff] %v439
      %444 = vst [vmem:[#allocation3 + $0x18] sm:$0xff] %v440
      %v445 = vld [vmem:[#allocation3] sm:$0xff]
      %v446 = vld [vmem:[#allocation3 + $0x8] sm:$0xff]
      %v447 = vld [vmem:[#allocation3 + $0x10] sm:$0xff]
      %v448 = vld [vmem:[#allocation3 + $0x18] sm:$0xff]
      %v449 = vld [vmem:[#allocation13] sm:$0xff]
      %v450 = vld [vmem:[#allocation13 + $0x8] sm:$0xff]
      %v451 = vld [vmem:[#allocation13 + $0x10] sm:$0xff]
      %v452 = vld [vmem:[#allocation13 + $0x18] sm:$0xff]
      %v453 = vld [vmem:[#allocation13 + $0x20] sm:$0xff]
      %v454 = vld [vmem:[#allocation13 + $0x28] sm:$0xff]
      %v455 = vld [vmem:[#allocation13 + $0x30] sm:$0xff]
      %v456 = vld [vmem:[#allocation13 + $0x38] sm:$0xff]
      %v457 = vld [vmem:[#allocation13 + $0x40] sm:$0xff]
      %v458 = vld [vmem:[#allocation13 + $0x48] sm:$0xff]
      %v459 = vld [vmem:[#allocation13 + $0x50] sm:$0xff]
      %v460 = vld [vmem:[#allocation13 + $0x58] sm:$0xff]
      %v461 = vld [vmem:[#allocation13 + $0x60] sm:$0xff]
      %v462 = vld [vmem:[#allocation13 + $0x68] sm:$0xff]
      %v463 = vld [vmem:[#allocation13 + $0x70] sm:$0xff]
      %v464 = vld [vmem:[#allocation13 + $0x78] sm:$0xff]
      %v465 = vld [vmem:[#allocation13 + $0x80] sm:$0xff]
      %v466 = vld [vmem:[#allocation13 + $0x88] sm:$0xff]
      %v467 = vld [vmem:[#allocation13 + $0x90] sm:$0xff]
      %v468 = vld [vmem:[#allocation13 + $0x98] sm:$0xff]
      %v469 = vld [vmem:[#allocation13 + $0xa0] sm:$0xff]
      %v470 = vld [vmem:[#allocation13 + $0xa8] sm:$0xff]
      %v471 = vld [vmem:[#allocation13 + $0xb0] sm:$0xff]
      %v472 = vld [vmem:[#allocation13 + $0xb8] sm:$0xff]
      %v473 = vld [vmem:[#allocation13 + $0xc0] sm:$0xff]
      %v474 = vld [vmem:[#allocation13 + $0xc8] sm:$0xff]
      %v475 = vld [vmem:[#allocation13 + $0xd0] sm:$0xff]
      %v476 = vld [vmem:[#allocation13 + $0xd8] sm:$0xff]
      %v477 = vld [vmem:[#allocation13 + $0xe0] sm:$0xff]
      %v478 = vld [vmem:[#allocation13 + $0xe8] sm:$0xff]
      %v479 = vld [vmem:[#allocation13 + $0xf0] sm:$0xff]
      %v480 = vld [vmem:[#allocation13 + $0xf8] sm:$0xff]
      %v481 = vld [vmem:[%s9] sm:$0x1]
      %v483 = vlaneseq
      %v484 = vshrl.u32 %v483, 7
      %v485 = vsub.s32 0, %v484
      %v486 = vrot.slane %v481, %v485
      %488 = vmatprep.subr.mxu0 0.0
      %489 = vmatpush1.msra.mxu0 %v449
      %490 = vmatprep.subr.mxu0 0.0
      %491 = vmatpush1.msra.mxu0 %v450
      %492 = vmatprep.subr.mxu0 0.0
      %493 = vmatpush1.msra.mxu0 %v451
      %494 = vmatprep.subr.mxu0 0.0
      %495 = vmatpush1.msra.mxu0 %v452
      %496 = vmatprep.subr.mxu0 0.0
      %497 = vmatpush1.msra.mxu0 %v453
      %498 = vmatprep.subr.mxu0 0.0
      %499 = vmatpush1.msra.mxu0 %v454
      %500 = vmatprep.subr.mxu0 0.0
      %501 = vmatpush1.msra.mxu0 %v455
      %502 = vmatprep.subr.mxu0 0.0
      %503 = vmatpush1.msra.mxu0 %v456
      %504 = vmatprep.subr.mxu0 0.0
      %505 = vmatpush1.msra.mxu0 %v457
      %506 = vmatprep.subr.mxu0 0.0
      %507 = vmatpush1.msra.mxu0 %v458
      %508 = vmatprep.subr.mxu0 0.0
      %509 = vmatpush1.msra.mxu0 %v459
      %510 = vmatprep.subr.mxu0 0.0
      %511 = vmatpush1.msra.mxu0 %v460
      %512 = vmatprep.subr.mxu0 0.0
      %513 = vmatpush1.msra.mxu0 %v461
      %514 = vmatprep.subr.mxu0 0.0
      %515 = vmatpush1.msra.mxu0 %v462
      %516 = vmatprep.subr.mxu0 0.0
      %517 = vmatpush1.msra.mxu0 %v463
      %518 = vmatprep.subr.mxu0 0.0
      %519 = vmatpush1.msra.mxu0 %v464
      %520 = vmatprep.subr.mxu0 0.0
      %521 = vmatpush1.msra.mxu0 %v465
      %522 = vmatprep.subr.mxu0 0.0
      %523 = vmatpush1.msra.mxu0 %v466
      %524 = vmatprep.subr.mxu0 0.0
      %525 = vmatpush1.msra.mxu0 %v467
      %526 = vmatprep.subr.mxu0 0.0
      %527 = vmatpush1.msra.mxu0 %v468
      %528 = vmatprep.subr.mxu0 0.0
      %529 = vmatpush1.msra.mxu0 %v469
      %530 = vmatprep.subr.mxu0 0.0
      %531 = vmatpush1.msra.mxu0 %v470
      %532 = vmatprep.subr.mxu0 0.0
      %533 = vmatpush1.msra.mxu0 %v471
      %534 = vmatprep.subr.mxu0 0.0
      %535 = vmatpush1.msra.mxu0 %v472
      %536 = vmatprep.subr.mxu0 0.0
      %537 = vmatpush1.msra.mxu0 %v473
      %538 = vmatprep.subr.mxu0 0.0
      %539 = vmatpush1.msra.mxu0 %v474
      %540 = vmatprep.subr.mxu0 0.0
      %541 = vmatpush1.msra.mxu0 %v475
      %542 = vmatprep.subr.mxu0 0.0
      %543 = vmatpush1.msra.mxu0 %v476
      %544 = vmatprep.subr.mxu0 0.0
      %545 = vmatpush1.msra.mxu0 %v477
      %546 = vmatprep.subr.mxu0 0.0
      %547 = vmatpush1.msra.mxu0 %v478
      %548 = vmatprep.subr.mxu0 0.0
      %549 = vmatpush1.msra.mxu0 %v479
      %550 = vmatprep.subr.mxu0 0.0
      %551 = vmatpush1.msra.mxu0 %v480
      %552 = vmatprep.mubr.f32.mxu0 %v446
      %553 = vmatmul.mubr.f32.gmra.mrb[0].mxu0 %v445
      %v554 = vpop.f32.mrb[0].mxu0
      %v555 = vadd.f32 %v486, %v554
      %v556 = vpop.f32.mrb[0].mxu0
      %557 = vmatprep.mubr.f32.mxu0 %v448
      %558 = vmatmul.mubr.f32.gmra.mrb[0].mxu0 %v447
      %v559 = vpop.f32.mrb[0].mxu0
      %v560 = vadd.f32 %v486, %v559
      %v561 = vpop.f32.mrb[0].mxu0
      %562 = vdwg.mxu0
      %v563 = vlaneseq
      %v564 = vand.u32 %v563, 127
      %vm565 = vcmp.lt.s32.totalorder %v564, 4
      %v566 = vsel %vm565, %v555, -1e+30
      %v567 = vsel %vm565, %v560, -1e+30
      %568 = vmax.xlane.f32.xlu0 %v566
      %v569 = vpop.xlane.xlu0 %568
      %570 = vmax.xlane.f32.xlu0 %v567
      %v571 = vpop.xlane.xlu0 %570
      %v572 = vsub.f32 %v566, %v569
      %v573 = vsub.f32 %v567, %v571
      %v574 = vmul.f32 %v572, 1.442695
      %v575 = vpow.pop %v574
      %v576 = vmul.f32 %v573, 1.442695
      %v577 = vpow.pop %v576
      %578 = vadd.xlane.f32.xlu0 %v575
      %v579 = vpop.xlane.xlu0 %578
      %580 = vadd.xlane.f32.xlu0 %v577
      %v581 = vpop.xlane.xlu0 %580
      %v582 = vlog2.pop %v579
      %v583 = vmul.f32 %v582, 0.6931472
      %v584 = vlog2.pop %v581
      %v585 = vmul.f32 %v584, 0.6931472
      %v586 = vadd.f32 %v569, %v583
      %v587 = vadd.f32 %v571, %v585
      %v588 = vsub.f32 %v566, %v586
      %v589 = vsub.f32 %v567, %v587
      %590 = vst [vmem:[#allocation15] sm:$0xff] %v588
      %591 = vst [vmem:[#allocation15 + $0x8] sm:$0xff] %v589
    $region73: #{tpu_custom_call.1} parent=1 // pred_fallthru
      _
    // Predicated region
    $region74: #{tpu_custom_call.1} parent=1 // pred_check
      _
    $region75: #{tpu_custom_call.1} parent=1 // pred_check_branch
      %593 = sbr.rel (0) target = $region77
    $region76: #{tpu_custom_call.1} parent=1 // pred_region
      %s595 = ssub.s32 256, 256
      %596 = vsyncadd [#allocation6], %s595
      %s597 = sshll.u32 [#allocation15], 4
      %s598 = int_to_ptr.vmem [resolvable:$true] %s597
      %603 = dma.vmem_to_hbm [thread:$0]  %s598, 256, %s10, [#allocation6], 128, 128, 8
    $region77: #{tpu_custom_call.1} parent=1 // pred_fallthru
      _
    // Predicated region
    $region78: #{tpu_custom_call.1} parent=1 // pred_check
      _
    $region79: #{tpu_custom_call.1} parent=1 // pred_check_branch
      %605 = sbr.rel (0) target = $region81
    $region80: #{tpu_custom_call.1} parent=1 // pred_region
      %606 = dma.done [#allocation6], 256
    $region81: #{tpu_custom_call.1} parent=1 // pred_fallthru
      _
    %607 = vsyncpa [#allocation5], 1
    %608 = vsyncpa [#allocation8], 1
    %609 = vsyncpa [#allocation11], 1
    %610 = vsyncpa [#allocation14], 1
    %611 = vsyncpa [#allocation6], 1

// kernel: tpu_custom_call.1
$region0: #{tpu_custom_call.1}
  #allocation0 [shape = 'u32[]', space=smem, size = 0x4, offset = 0x4, fixed_abs, tag = 'smem constant byte address 0x4 - core index']
  #allocation1 [shape = 'u32[144,128]{1,0:T(1,128)}', space=vmem, size = 0x12000, scoped, tag = 'internal scratch']
  #allocation2 [shape = 'f32[16,128]{1,0:T(8,128)}', space=vmem, size = 0x2000, scoped, tag = 'scratch operand']
  #allocation3 [shape = 'f32[16,256]{1,0:T(8,128)}', space=vmem, size = 0x4000, scoped, tag = 'scratch operand']
  %s0 = inlined_call_operand.hbm [shape: f32[16,128], index: 0, kind: input, shape index: {}]
  %s1 = inlined_call_operand.hbm [shape: f32[16,128], index: 1, kind: input, shape index: {}]
  %s2 = inlined_call_operand.hbm [shape: f32[128,128], index: 2, kind: input, shape index: {}]
  %s3 = inlined_call_operand.vmem [shape: f32[1,128], index: 3, kind: input, shape index: {}]
  %s4 = inlined_call_operand.hbm [shape: f32[128,128], index: 4, kind: input, shape index: {}]
  %s5 = inlined_call_operand.vmem [shape: f32[1,128], index: 5, kind: input, shape index: {}]
  %s6 = inlined_call_operand.hbm [shape: f32[128,128], index: 6, kind: input, shape index: {}]
  %s7 = inlined_call_operand.vmem [shape: f32[1,128], index: 7, kind: input, shape index: {}]
  %s8 = inlined_call_operand.hbm [shape: f32[256,128], index: 8, kind: input, shape index: {}]
  %s9 = inlined_call_operand.vmem [shape: f32[1,128], index: 9, kind: input, shape index: {}]
  %s10 = inlined_call_operand.hbm [shape: f32[16,128], index: 10, kind: output, shape index: {}]
  %s11 = sld [smem:[#allocation0]]
  $region82: #{tpu_custom_call.1} parent=0
    _
  %s13 = ssub.s32 1, %s11
  %s14 = scalar_select 0, %s13, %s11
  $region1: #{tpu_custom_call.1} parent=0
    #allocation4 [shape = 'u8[8192]{0}', space=vmem, size = 0x2000, scoped, tag = 'input window, operand 0, single buffered']
    #allocation5 [shape = 's32[1]{0}', space=sflag, size = 0x4, scoped, tag = 'scoped memory for tpu_custom_call.1']
    #allocation6 [shape = 's32[1]{0}', space=sflag, size = 0x4, scoped, tag = 'scoped memory for tpu_custom_call.1']
    #allocation7 [shape = 'u8[8192]{0}', space=vmem, size = 0x2000, scoped, tag = 'input window, operand 1, single buffered']
    #allocation8 [shape = 's32[1]{0}', space=sflag, size = 0x4, scoped, tag = 'scoped memory for tpu_custom_call.1']
    #allocation9 [shape = 'u8[65536]{0}', space=vmem, size = 0x10000, scoped, tag = 'input window, operand 2, single buffered']
    #allocation10 [shape = 'u8[65536]{0}', space=vmem, size = 0x10000, scoped, tag = 'input window, operand 4, single buffered']
    #allocation11 [shape = 's32[1]{0}', space=sflag, size = 0x4, scoped, tag = 'scoped memory for tpu_custom_call.1']
    #allocation12 [shape = 'u8[65536]{0}', space=vmem, size = 0x10000, scoped, tag = 'input window, operand 6, single buffered']
    #allocation13 [shape = 'u8[131072]{0}', space=vmem, size = 0x20000, scoped, tag = 'input window, operand 8, single buffered']
    #allocation14 [shape = 's32[1]{0}', space=sflag, size = 0x4, scoped, tag = 'scoped memory for tpu_custom_call.1']
    #allocation15 [shape = 'u8[8192]{0}', space=vmem, size = 0x2000, scoped, tag = 'output window, operand 0, single buffered']
    %15 = vsyncpa [#allocation5], 0
    %16 = vsyncpa [#allocation8], 0
    %17 = vsyncpa [#allocation11], 0
    %18 = vsyncpa [#allocation14], 0
    %19 = vsyncpa [#allocation6], 0
    // Predicated region
    $region2: #{tpu_custom_call.1} parent=1 // pred_check
      _
    $region3: #{tpu_custom_call.1} parent=1 // pred_check_branch
      %21 = sbr.rel (0) target = $region5
    $region4: #{tpu_custom_call.1} parent=1 // pred_region
      %s23 = ssub.s32 256, 256
      %24 = vsyncadd [#allocation5], %s23
      %s25 = sshll.u32 [#allocation4], 4
      %s26 = int_to_ptr.vmem [resolvable:$true] %s25
      %31 = dma.hbm_to_vmem [thread:$0]  %s0, 256, %s26, [#allocation5], 128, 128, 8
    $region5: #{tpu_custom_call.1} parent=1 // pred_fallthru
      _
    // Predicated region
    $region6: #{tpu_custom_call.1} parent=1 // pred_check
      _
    $region7: #{tpu_custom_call.1} parent=1 // pred_check_branch
      %33 = sbr.rel (0) target = $region9
    $region8: #{tpu_custom_call.1} parent=1 // pred_region
      %s35 = ssub.s32 256, 256
      %36 = vsyncadd [#allocation8], %s35
      %s37 = sshll.u32 [#allocation7], 4
      %s38 = int_to_ptr.vmem [resolvable:$true] %s37
      %43 = dma.hbm_to_vmem [thread:$0]  %s1, 256, %s38, [#allocation8], 128, 128, 8
    $region9: #{tpu_custom_call.1} parent=1 // pred_fallthru
      _
    // Predicated region
    $region10: #{tpu_custom_call.1} parent=1 // pred_check
      _
    $region11: #{tpu_custom_call.1} parent=1 // pred_check_branch
      %45 = sbr.rel (0) target = $region13
    $region12: #{tpu_custom_call.1} parent=1 // pred_region
      %s47 = ssub.s32 2048, 2048
      %48 = vsyncadd [#allocation8], %s47
      %s49 = sshll.u32 [#allocation9], 4
      %s50 = int_to_ptr.vmem [resolvable:$true] %s49
      %55 = dma.hbm_to_vmem [thread:$0]  %s2, 2048, %s50, [#allocation8], 128, 128, 8
    $region13: #{tpu_custom_call.1} parent=1 // pred_fallthru
      _
    // Predicated region
    $region14: #{tpu_custom_call.1} parent=1 // pred_check
      _
    $region15: #{tpu_custom_call.1} parent=1 // pred_check_branch
      %57 = sbr.rel (0) target = $region17
    $region16: #{tpu_custom_call.1} parent=1 // pred_region
      _
    $region17: #{tpu_custom_call.1} parent=1 // pred_fallthru
      _
    // Predicated region
    $region18: #{tpu_custom_call.1} parent=1 // pred_check
      _
    $region19: #{tpu_custom_call.1} parent=1 // pred_check_branch
      %59 = sbr.rel (0) target = $region21
    $region20: #{tpu_custom_call.1} parent=1 // pred_region
      %s61 = ssub.s32 2048, 2048
      %62 = vsyncadd [#allocation11], %s61
      %s63 = sshll.u32 [#allocation10], 4
      %s64 = int_to_ptr.vmem [resolvable:$true] %s63
      %69 = dma.hbm_to_vmem [thread:$0]  %s4, 2048, %s64, [#allocation11], 128, 128, 8
    $region21: #{tpu_custom_call.1} parent=1 // pred_fallthru
      _
    // Predicated region
    $region22: #{tpu_custom_call.1} parent=1 // pred_check
      _
    $region23: #{tpu_custom_call.1} parent=1 // pred_check_branch
      %71 = sbr.rel (0) target = $region25
    $region24: #{tpu_custom_call.1} parent=1 // pred_region
      _
    $region25: #{tpu_custom_call.1} parent=1 // pred_fallthru
      _
    // Predicated region
    $region26: #{tpu_custom_call.1} parent=1 // pred_check
      _
    $region27: #{tpu_custom_call.1} parent=1 // pred_check_branch
      %73 = sbr.rel (0) target = $region29
    $region28: #{tpu_custom_call.1} parent=1 // pred_region
      %s75 = ssub.s32 2048, 2048
      %76 = vsyncadd [#allocation11], %s75
      %s77 = sshll.u32 [#allocation12], 4
      %s78 = int_to_ptr.vmem [resolvable:$true] %s77
      %83 = dma.hbm_to_vmem [thread:$0]  %s6, 2048, %s78, [#allocation11], 128, 128, 8
    $region29: #{tpu_custom_call.1} parent=1 // pred_fallthru
      _
    // Predicated region
    $region30: #{tpu_custom_call.1} parent=1 // pred_check
      _
    $region31: #{tpu_custom_call.1} parent=1 // pred_check_branch
      %85 = sbr.rel (0) target = $region33
    $region32: #{tpu_custom_call.1} parent=1 // pred_region
      _
    $region33: #{tpu_custom_call.1} parent=1 // pred_fallthru
      _
    // Predicated region
    $region34: #{tpu_custom_call.1} parent=1 // pred_check
      _
    $region35: #{tpu_custom_call.1} parent=1 // pred_check_branch
      %87 = sbr.rel (0) target = $region37
    $region36: #{tpu_custom_call.1} parent=1 // pred_region
      %s89 = ssub.s32 4096, 4096
      %90 = vsyncadd [#allocation14], %s89
      %s91 = sshll.u32 [#allocation13], 4
      %s92 = int_to_ptr.vmem [resolvable:$true] %s91
      %97 = dma.hbm_to_vmem [thread:$0]  %s8, 4096, %s92, [#allocation14], 128, 128, 8
    $region37: #{tpu_custom_call.1} parent=1 // pred_fallthru
      _
    // Predicated region
    $region38: #{tpu_custom_call.1} parent=1 // pred_check
      _
    $region39: #{tpu_custom_call.1} parent=1 // pred_check_branch
      %99 = sbr.rel (0) target = $region41
    $region40: #{tpu_custom_call.1} parent=1 // pred_region
      _
    $region41: #{tpu_custom_call.1} parent=1 // pred_fallthru
      _
    // Predicated region
    $region42: #{tpu_custom_call.1} parent=1 // pred_check
      _
    $region43: #{tpu_custom_call.1} parent=1 // pred_check_branch
      %101 = sbr.rel (0) target = $region45
    $region44: #{tpu_custom_call.1} parent=1 // pred_region
      %102 = dma.done [#allocation5], 256
    $region45: #{tpu_custom_call.1} parent=1 // pred_fallthru
      _
    // Predicated region
    $region46: #{tpu_custom_call.1} parent=1 // pred_check
      _
    $region47: #{tpu_custom_call.1} parent=1 // pred_check_branch
      %104 = sbr.rel (0) target = $region49
    $region48: #{tpu_custom_call.1} parent=1 // pred_region
      %105 = dma.done [#allocation8], 256
    $region49: #{tpu_custom_call.1} parent=1 // pred_fallthru
      _
    // Predicated region
    $region50: #{tpu_custom_call.1} parent=1 // pred_check
      _
    $region51: #{tpu_custom_call.1} parent=1 // pred_check_branch
      %107 = sbr.rel (0) target = $region53
    $region52: #{tpu_custom_call.1} parent=1 // pred_region
      %108 = dma.done [#allocation8], 2048
    $region53: #{tpu_custom_call.1} parent=1 // pred_fallthru
      _
    // Predicated region
    $region54: #{tpu_custom_call.1} parent=1 // pred_check
      _
    $region55: #{tpu_custom_call.1} parent=1 // pred_check_branch
      %110 = sbr.rel (0) target = $region57
    $region56: #{tpu_custom_call.1} parent=1 // pred_region
      %111 = dma.done [#allocation11], 2048
    $region57: #{tpu_custom_call.1} parent=1 // pred_fallthru
      _
    // Predicated region
    $region58: #{tpu_custom_call.1} parent=1 // pred_check
      _
    $region59: #{tpu_custom_call.1} parent=1 // pred_check_branch
      %113 = sbr.rel (0) target = $region61
    $region60: #{tpu_custom_call.1} parent=1 // pred_region
      %114 = dma.done [#allocation11], 2048
    $region61: #{tpu_custom_call.1} parent=1 // pred_fallthru
      _
    // Predicated region
    $region62: #{tpu_custom_call.1} parent=1 // pred_check
      _
    $region63: #{tpu_custom_call.1} parent=1 // pred_check_branch
      %116 = sbr.rel (0) target = $region65
    $region64: #{tpu_custom_call.1} parent=1 // pred_region
      %117 = dma.done [#allocation14], 4096
    $region65: #{tpu_custom_call.1} parent=1 // pred_fallthru
      _
    %p118 = scmp.eq.s32.totalorder 0, 0
    // Predicated region
    $region66: #{tpu_custom_call.1} parent=1 // pred_check
      %p119 = pneg %p118
    $region67: #{tpu_custom_call.1} parent=1 // pred_check_branch
      %121 = sbr.rel (%p119) target = $region69
    $region68: #{tpu_custom_call.1} parent=1 // pred_region
      %122 = vst [vmem:[#allocation2] sm:$0xff] 0.0
      %123 = vst [vmem:[#allocation2 + $0x8] sm:$0xff] 0.0
    $region69: #{tpu_custom_call.1} parent=1 // pred_fallthru
      _
    %v124 = vld [vmem:[#allocation2] sm:$0xff]
    %v125 = vld [vmem:[#allocation2 + $0x8] sm:$0xff]
    %v126 = vld [vmem:[#allocation4] sm:$0xff]
    %v127 = vld [vmem:[#allocation4 + $0x8] sm:$0xff]
    %v128 = vld [vmem:[#allocation9] sm:$0xff]
    %v129 = vld [vmem:[#allocation9 + $0x8] sm:$0xff]
    %v130 = vld [vmem:[#allocation9 + $0x10] sm:$0xff]
    %v131 = vld [vmem:[#allocation9 + $0x18] sm:$0xff]
    %v132 = vld [vmem:[#allocation9 + $0x20] sm:$0xff]
    %v133 = vld [vmem:[#allocation9 + $0x28] sm:$0xff]
    %v134 = vld [vmem:[#allocation9 + $0x30] sm:$0xff]
    %v135 = vld [vmem:[#allocation9 + $0x38] sm:$0xff]
    %v136 = vld [vmem:[#allocation9 + $0x40] sm:$0xff]
    %v137 = vld [vmem:[#allocation9 + $0x48] sm:$0xff]
    %v138 = vld [vmem:[#allocation9 + $0x50] sm:$0xff]
    %v139 = vld [vmem:[#allocation9 + $0x58] sm:$0xff]
    %v140 = vld [vmem:[#allocation9 + $0x60] sm:$0xff]
    %v141 = vld [vmem:[#allocation9 + $0x68] sm:$0xff]
    %v142 = vld [vmem:[#allocation9 + $0x70] sm:$0xff]
    %v143 = vld [vmem:[#allocation9 + $0x78] sm:$0xff]
    %144 = vmatprep.subr.mxu0 0.0
    %145 = vmatpush1.msra.mxu0 %v128
    %146 = vmatprep.subr.mxu0 0.0
    %147 = vmatpush1.msra.mxu0 %v129
    %148 = vmatprep.subr.mxu0 0.0
    %149 = vmatpush1.msra.mxu0 %v130
    %150 = vmatprep.subr.mxu0 0.0
    %151 = vmatpush1.msra.mxu0 %v131
    %152 = vmatprep.subr.mxu0 0.0
    %153 = vmatpush1.msra.mxu0 %v132
    %154 = vmatprep.subr.mxu0 0.0
    %155 = vmatpush1.msra.mxu0 %v133
    %156 = vmatprep.subr.mxu0 0.0
    %157 = vmatpush1.msra.mxu0 %v134
    %158 = vmatprep.subr.mxu0 0.0
    %159 = vmatpush1.msra.mxu0 %v135
    %160 = vmatprep.subr.mxu0 0.0
    %161 = vmatpush1.msra.mxu0 %v136
    %162 = vmatprep.subr.mxu0 0.0
    %163 = vmatpush1.msra.mxu0 %v137
    %164 = vmatprep.subr.mxu0 0.0
    %165 = vmatpush1.msra.mxu0 %v138
    %166 = vmatprep.subr.mxu0 0.0
    %167 = vmatpush1.msra.mxu0 %v139
    %168 = vmatprep.subr.mxu0 0.0
    %169 = vmatpush1.msra.mxu0 %v140
    %170 = vmatprep.subr.mxu0 0.0
    %171 = vmatpush1.msra.mxu0 %v141
    %172 = vmatprep.subr.mxu0 0.0
    %173 = vmatpush1.msra.mxu0 %v142
    %174 = vmatprep.subr.mxu0 0.0
    %175 = vmatpush1.msra.mxu0 %v143
    %176 = vmatprep.subr.mxu0 0.0
    %177 = vmatpush1.msra.mxu0 0.0
    %178 = vmatprep.subr.mxu0 0.0
    %179 = vmatpush1.msra.mxu0 0.0
    %180 = vmatprep.subr.mxu0 0.0
    %181 = vmatpush1.msra.mxu0 0.0
    %182 = vmatprep.subr.mxu0 0.0
    %183 = vmatpush1.msra.mxu0 0.0
    %184 = vmatprep.subr.mxu0 0.0
    %185 = vmatpush1.msra.mxu0 0.0
    %186 = vmatprep.subr.mxu0 0.0
    %187 = vmatpush1.msra.mxu0 0.0
    %188 = vmatprep.subr.mxu0 0.0
    %189 = vmatpush1.msra.mxu0 0.0
    %190 = vmatprep.subr.mxu0 0.0
    %191 = vmatpush1.msra.mxu0 0.0
    %192 = vmatprep.subr.mxu0 0.0
    %193 = vmatpush1.msra.mxu0 0.0
    %194 = vmatprep.subr.mxu0 0.0
    %195 = vmatpush1.msra.mxu0 0.0
    %196 = vmatprep.subr.mxu0 0.0
    %197 = vmatpush1.msra.mxu0 0.0
    %198 = vmatprep.subr.mxu0 0.0
    %199 = vmatpush1.msra.mxu0 0.0
    %200 = vmatprep.subr.mxu0 0.0
    %201 = vmatpush1.msra.mxu0 0.0
    %202 = vmatprep.subr.mxu0 0.0
    %203 = vmatpush1.msra.mxu0 0.0
    %204 = vmatprep.subr.mxu0 0.0
    %205 = vmatpush1.msra.mxu0 0.0
    %206 = vmatprep.subr.mxu0 0.0
    %207 = vmatpush1.msra.mxu0 0.0
    %208 = vmatprep.mubr.f32.mxu0 0.0
    %209 = vmatmul.mubr.f32.gmra.mrb[0].mxu0 %v126
    %v210 = vpop.f32.mrb[0].mxu0
    %v211 = vadd.f32 0.0, %v210
    %v212 = vpop.f32.mrb[0].mxu0
    %213 = vmatprep.mubr.f32.mxu0 0.0
    %214 = vmatmul.mubr.f32.gmra.mrb[0].mxu0 %v127
    %v215 = vpop.f32.mrb[0].mxu0
    %v216 = vadd.f32 0.0, %v215
    %v217 = vpop.f32.mrb[0].mxu0
    %218 = vdwg.mxu0
    %v219 = vadd.f32 %v124, %v211
    %v220 = vadd.f32 %v125, %v216
    %221 = vst [vmem:[#allocation2] sm:$0xff] %v219
    %222 = vst [vmem:[#allocation2 + $0x8] sm:$0xff] %v220
    // Predicated region
    $region70: #{tpu_custom_call.1} parent=1 // pred_check
      %p223 = pneg %p118
    $region71: #{tpu_custom_call.1} parent=1 // pred_check_branch
      %225 = sbr.rel (%p223) target = $region73
    $region72: #{tpu_custom_call.1} parent=1 // pred_region
      %v226 = vld [vmem:[#allocation2] sm:$0xff]
      %v227 = vld [vmem:[#allocation2 + $0x8] sm:$0xff]
      %v228 = vld [vmem:[%s3] sm:$0x1]
      %v230 = vlaneseq
      %v231 = vshrl.u32 %v230, 7
      %v232 = vsub.s32 0, %v231
      %v233 = vrot.slane %v228, %v232
      %v235 = vadd.f32 %v226, %v233
      %v236 = vadd.f32 %v227, %v233
      %v237 = vmax.f32 %v235, 0.0
      %v238 = vmax.f32 %v236, 0.0
      %v239 = vld [vmem:[#allocation10] sm:$0xff]
      %v240 = vld [vmem:[#allocation10 + $0x8] sm:$0xff]
      %v241 = vld [vmem:[#allocation10 + $0x10] sm:$0xff]
      %v242 = vld [vmem:[#allocation10 + $0x18] sm:$0xff]
      %v243 = vld [vmem:[#allocation10 + $0x20] sm:$0xff]
      %v244 = vld [vmem:[#allocation10 + $0x28] sm:$0xff]
      %v245 = vld [vmem:[#allocation10 + $0x30] sm:$0xff]
      %v246 = vld [vmem:[#allocation10 + $0x38] sm:$0xff]
      %v247 = vld [vmem:[#allocation10 + $0x40] sm:$0xff]
      %v248 = vld [vmem:[#allocation10 + $0x48] sm:$0xff]
      %v249 = vld [vmem:[#allocation10 + $0x50] sm:$0xff]
      %v250 = vld [vmem:[#allocation10 + $0x58] sm:$0xff]
      %v251 = vld [vmem:[#allocation10 + $0x60] sm:$0xff]
      %v252 = vld [vmem:[#allocation10 + $0x68] sm:$0xff]
      %v253 = vld [vmem:[#allocation10 + $0x70] sm:$0xff]
      %v254 = vld [vmem:[#allocation10 + $0x78] sm:$0xff]
      %v255 = vld [vmem:[%s5] sm:$0x1]
      %v257 = vlaneseq
      %v258 = vshrl.u32 %v257, 7
      %v259 = vsub.s32 0, %v258
      %v260 = vrot.slane %v255, %v259
      %262 = vmatprep.subr.mxu0 0.0
      %263 = vmatpush1.msra.mxu0 %v239
      %264 = vmatprep.subr.mxu0 0.0
      %265 = vmatpush1.msra.mxu0 %v240
      %266 = vmatprep.subr.mxu0 0.0
      %267 = vmatpush1.msra.mxu0 %v241
      %268 = vmatprep.subr.mxu0 0.0
      %269 = vmatpush1.msra.mxu0 %v242
      %270 = vmatprep.subr.mxu0 0.0
      %271 = vmatpush1.msra.mxu0 %v243
      %272 = vmatprep.subr.mxu0 0.0
      %273 = vmatpush1.msra.mxu0 %v244
      %274 = vmatprep.subr.mxu0 0.0
      %275 = vmatpush1.msra.mxu0 %v245
      %276 = vmatprep.subr.mxu0 0.0
      %277 = vmatpush1.msra.mxu0 %v246
      %278 = vmatprep.subr.mxu0 0.0
      %279 = vmatpush1.msra.mxu0 %v247
      %280 = vmatprep.subr.mxu0 0.0
      %281 = vmatpush1.msra.mxu0 %v248
      %282 = vmatprep.subr.mxu0 0.0
      %283 = vmatpush1.msra.mxu0 %v249
      %284 = vmatprep.subr.mxu0 0.0
      %285 = vmatpush1.msra.mxu0 %v250
      %286 = vmatprep.subr.mxu0 0.0
      %287 = vmatpush1.msra.mxu0 %v251
      %288 = vmatprep.subr.mxu0 0.0
      %289 = vmatpush1.msra.mxu0 %v252
      %290 = vmatprep.subr.mxu0 0.0
      %291 = vmatpush1.msra.mxu0 %v253
      %292 = vmatprep.subr.mxu0 0.0
      %293 = vmatpush1.msra.mxu0 %v254
      %294 = vmatprep.subr.mxu0 0.0
      %295 = vmatpush1.msra.mxu0 0.0
      %296 = vmatprep.subr.mxu0 0.0
      %297 = vmatpush1.msra.mxu0 0.0
      %298 = vmatprep.subr.mxu0 0.0
      %299 = vmatpush1.msra.mxu0 0.0
      %300 = vmatprep.subr.mxu0 0.0
      %301 = vmatpush1.msra.mxu0 0.0
      %302 = vmatprep.subr.mxu0 0.0
      %303 = vmatpush1.msra.mxu0 0.0
      %304 = vmatprep.subr.mxu0 0.0
      %305 = vmatpush1.msra.mxu0 0.0
      %306 = vmatprep.subr.mxu0 0.0
      %307 = vmatpush1.msra.mxu0 0.0
      %308 = vmatprep.subr.mxu0 0.0
      %309 = vmatpush1.msra.mxu0 0.0
      %310 = vmatprep.subr.mxu0 0.0
      %311 = vmatpush1.msra.mxu0 0.0
      %312 = vmatprep.subr.mxu0 0.0
      %313 = vmatpush1.msra.mxu0 0.0
      %314 = vmatprep.subr.mxu0 0.0
      %315 = vmatpush1.msra.mxu0 0.0
      %316 = vmatprep.subr.mxu0 0.0
      %317 = vmatpush1.msra.mxu0 0.0
      %318 = vmatprep.subr.mxu0 0.0
      %319 = vmatpush1.msra.mxu0 0.0
      %320 = vmatprep.subr.mxu0 0.0
      %321 = vmatpush1.msra.mxu0 0.0
      %322 = vmatprep.subr.mxu0 0.0
      %323 = vmatpush1.msra.mxu0 0.0
      %324 = vmatprep.subr.mxu0 0.0
      %325 = vmatpush1.msra.mxu0 0.0
      %326 = vmatprep.mubr.f32.mxu0 0.0
      %327 = vmatmul.mubr.f32.gmra.mrb[0].mxu0 %v237
      %v328 = vpop.f32.mrb[0].mxu0
      %v329 = vadd.f32 %v260, %v328
      %v330 = vpop.f32.mrb[0].mxu0
      %331 = vmatprep.mubr.f32.mxu0 0.0
      %332 = vmatmul.mubr.f32.gmra.mrb[0].mxu0 %v238
      %v333 = vpop.f32.mrb[0].mxu0
      %v334 = vadd.f32 %v260, %v333
      %v335 = vpop.f32.mrb[0].mxu0
      %336 = vdwg.mxu0
      %v337 = vmax.f32 %v329, 0.0
      %v338 = vmax.f32 %v334, 0.0
      %v339 = vld [vmem:[#allocation7] sm:$0xff]
      %v340 = vld [vmem:[#allocation7 + $0x8] sm:$0xff]
      %v341 = vld [vmem:[#allocation12] sm:$0xff]
      %v342 = vld [vmem:[#allocation12 + $0x8] sm:$0xff]
      %v343 = vld [vmem:[#allocation12 + $0x10] sm:$0xff]
      %v344 = vld [vmem:[#allocation12 + $0x18] sm:$0xff]
      %v345 = vld [vmem:[#allocation12 + $0x20] sm:$0xff]
      %v346 = vld [vmem:[#allocation12 + $0x28] sm:$0xff]
      %v347 = vld [vmem:[#allocation12 + $0x30] sm:$0xff]
      %v348 = vld [vmem:[#allocation12 + $0x38] sm:$0xff]
      %v349 = vld [vmem:[#allocation12 + $0x40] sm:$0xff]
      %v350 = vld [vmem:[#allocation12 + $0x48] sm:$0xff]
      %v351 = vld [vmem:[#allocation12 + $0x50] sm:$0xff]
      %v352 = vld [vmem:[#allocation12 + $0x58] sm:$0xff]
      %v353 = vld [vmem:[#allocation12 + $0x60] sm:$0xff]
      %v354 = vld [vmem:[#allocation12 + $0x68] sm:$0xff]
      %v355 = vld [vmem:[#allocation12 + $0x70] sm:$0xff]
      %v356 = vld [vmem:[#allocation12 + $0x78] sm:$0xff]
      %v357 = vld [vmem:[%s7] sm:$0x1]
      %v359 = vlaneseq
      %v360 = vshrl.u32 %v359, 7
      %v361 = vsub.s32 0, %v360
      %v362 = vrot.slane %v357, %v361
      %364 = vmatprep.subr.mxu0 0.0
      %365 = vmatpush1.msra.mxu0 %v341
      %366 = vmatprep.subr.mxu0 0.0
      %367 = vmatpush1.msra.mxu0 %v342
      %368 = vmatprep.subr.mxu0 0.0
      %369 = vmatpush1.msra.mxu0 %v343
      %370 = vmatprep.subr.mxu0 0.0
      %371 = vmatpush1.msra.mxu0 %v344
      %372 = vmatprep.subr.mxu0 0.0
      %373 = vmatpush1.msra.mxu0 %v345
      %374 = vmatprep.subr.mxu0 0.0
      %375 = vmatpush1.msra.mxu0 %v346
      %376 = vmatprep.subr.mxu0 0.0
      %377 = vmatpush1.msra.mxu0 %v347
      %378 = vmatprep.subr.mxu0 0.0
      %379 = vmatpush1.msra.mxu0 %v348
      %380 = vmatprep.subr.mxu0 0.0
      %381 = vmatpush1.msra.mxu0 %v349
      %382 = vmatprep.subr.mxu0 0.0
      %383 = vmatpush1.msra.mxu0 %v350
      %384 = vmatprep.subr.mxu0 0.0
      %385 = vmatpush1.msra.mxu0 %v351
      %386 = vmatprep.subr.mxu0 0.0
      %387 = vmatpush1.msra.mxu0 %v352
      %388 = vmatprep.subr.mxu0 0.0
      %389 = vmatpush1.msra.mxu0 %v353
      %390 = vmatprep.subr.mxu0 0.0
      %391 = vmatpush1.msra.mxu0 %v354
      %392 = vmatprep.subr.mxu0 0.0
      %393 = vmatpush1.msra.mxu0 %v355
      %394 = vmatprep.subr.mxu0 0.0
      %395 = vmatpush1.msra.mxu0 %v356
      %396 = vmatprep.subr.mxu0 0.0
      %397 = vmatpush1.msra.mxu0 0.0
      %398 = vmatprep.subr.mxu0 0.0
      %399 = vmatpush1.msra.mxu0 0.0
      %400 = vmatprep.subr.mxu0 0.0
      %401 = vmatpush1.msra.mxu0 0.0
      %402 = vmatprep.subr.mxu0 0.0
      %403 = vmatpush1.msra.mxu0 0.0
      %404 = vmatprep.subr.mxu0 0.0
      %405 = vmatpush1.msra.mxu0 0.0
      %406 = vmatprep.subr.mxu0 0.0
      %407 = vmatpush1.msra.mxu0 0.0
      %408 = vmatprep.subr.mxu0 0.0
      %409 = vmatpush1.msra.mxu0 0.0
      %410 = vmatprep.subr.mxu0 0.0
      %411 = vmatpush1.msra.mxu0 0.0
      %412 = vmatprep.subr.mxu0 0.0
      %413 = vmatpush1.msra.mxu0 0.0
      %414 = vmatprep.subr.mxu0 0.0
      %415 = vmatpush1.msra.mxu0 0.0
      %416 = vmatprep.subr.mxu0 0.0
      %417 = vmatpush1.msra.mxu0 0.0
      %418 = vmatprep.subr.mxu0 0.0
      %419 = vmatpush1.msra.mxu0 0.0
      %420 = vmatprep.subr.mxu0 0.0
      %421 = vmatpush1.msra.mxu0 0.0
      %422 = vmatprep.subr.mxu0 0.0
      %423 = vmatpush1.msra.mxu0 0.0
      %424 = vmatprep.subr.mxu0 0.0
      %425 = vmatpush1.msra.mxu0 0.0
      %426 = vmatprep.subr.mxu0 0.0
      %427 = vmatpush1.msra.mxu0 0.0
      %428 = vmatprep.mubr.f32.mxu0 0.0
      %429 = vmatmul.mubr.f32.gmra.mrb[0].mxu0 %v339
      %v430 = vpop.f32.mrb[0].mxu0
      %v431 = vadd.f32 %v362, %v430
      %v432 = vpop.f32.mrb[0].mxu0
      %433 = vmatprep.mubr.f32.mxu0 0.0
      %434 = vmatmul.mubr.f32.gmra.mrb[0].mxu0 %v340
      %v435 = vpop.f32.mrb[0].mxu0
      %v436 = vadd.f32 %v362, %v435
      %v437 = vpop.f32.mrb[0].mxu0
      %438 = vdwg.mxu0
      %v439 = vmax.f32 %v431, 0.0
      %v440 = vmax.f32 %v436, 0.0
      %441 = vst [vmem:[#allocation3] sm:$0xff] %v337
      %442 = vst [vmem:[#allocation3 + $0x10] sm:$0xff] %v338
      %443 = vst [vmem:[#allocation3 + $0x8] sm:$0xff] %v439
      %444 = vst [vmem:[#allocation3 + $0x18] sm:$0xff] %v440
      %v445 = vld [vmem:[#allocation3] sm:$0xff]
      %v446 = vld [vmem:[#allocation3 + $0x8] sm:$0xff]
      %v447 = vld [vmem:[#allocation3 + $0x10] sm:$0xff]
      %v448 = vld [vmem:[#allocation3 + $0x18] sm:$0xff]
      %v449 = vld [vmem:[#allocation13] sm:$0xff]
      %v450 = vld [vmem:[#allocation13 + $0x8] sm:$0xff]
      %v451 = vld [vmem:[#allocation13 + $0x10] sm:$0xff]
      %v452 = vld [vmem:[#allocation13 + $0x18] sm:$0xff]
      %v453 = vld [vmem:[#allocation13 + $0x20] sm:$0xff]
      %v454 = vld [vmem:[#allocation13 + $0x28] sm:$0xff]
      %v455 = vld [vmem:[#allocation13 + $0x30] sm:$0xff]
      %v456 = vld [vmem:[#allocation13 + $0x38] sm:$0xff]
      %v457 = vld [vmem:[#allocation13 + $0x40] sm:$0xff]
      %v458 = vld [vmem:[#allocation13 + $0x48] sm:$0xff]
      %v459 = vld [vmem:[#allocation13 + $0x50] sm:$0xff]
      %v460 = vld [vmem:[#allocation13 + $0x58] sm:$0xff]
      %v461 = vld [vmem:[#allocation13 + $0x60] sm:$0xff]
      %v462 = vld [vmem:[#allocation13 + $0x68] sm:$0xff]
      %v463 = vld [vmem:[#allocation13 + $0x70] sm:$0xff]
      %v464 = vld [vmem:[#allocation13 + $0x78] sm:$0xff]
      %v465 = vld [vmem:[#allocation13 + $0x80] sm:$0xff]
      %v466 = vld [vmem:[#allocation13 + $0x88] sm:$0xff]
      %v467 = vld [vmem:[#allocation13 + $0x90] sm:$0xff]
      %v468 = vld [vmem:[#allocation13 + $0x98] sm:$0xff]
      %v469 = vld [vmem:[#allocation13 + $0xa0] sm:$0xff]
      %v470 = vld [vmem:[#allocation13 + $0xa8] sm:$0xff]
      %v471 = vld [vmem:[#allocation13 + $0xb0] sm:$0xff]
      %v472 = vld [vmem:[#allocation13 + $0xb8] sm:$0xff]
      %v473 = vld [vmem:[#allocation13 + $0xc0] sm:$0xff]
      %v474 = vld [vmem:[#allocation13 + $0xc8] sm:$0xff]
      %v475 = vld [vmem:[#allocation13 + $0xd0] sm:$0xff]
      %v476 = vld [vmem:[#allocation13 + $0xd8] sm:$0xff]
      %v477 = vld [vmem:[#allocation13 + $0xe0] sm:$0xff]
      %v478 = vld [vmem:[#allocation13 + $0xe8] sm:$0xff]
      %v479 = vld [vmem:[#allocation13 + $0xf0] sm:$0xff]
      %v480 = vld [vmem:[#allocation13 + $0xf8] sm:$0xff]
      %v481 = vld [vmem:[%s9] sm:$0x1]
      %v483 = vlaneseq
      %v484 = vshrl.u32 %v483, 7
      %v485 = vsub.s32 0, %v484
      %v486 = vrot.slane %v481, %v485
      %488 = vmatprep.subr.mxu0 0.0
      %489 = vmatpush1.msra.mxu0 %v449
      %490 = vmatprep.subr.mxu0 0.0
      %491 = vmatpush1.msra.mxu0 %v450
      %492 = vmatprep.subr.mxu0 0.0
      %493 = vmatpush1.msra.mxu0 %v451
      %494 = vmatprep.subr.mxu0 0.0
      %495 = vmatpush1.msra.mxu0 %v452
      %496 = vmatprep.subr.mxu0 0.0
      %497 = vmatpush1.msra.mxu0 %v453
      %498 = vmatprep.subr.mxu0 0.0
      %499 = vmatpush1.msra.mxu0 %v454
      %500 = vmatprep.subr.mxu0 0.0
      %501 = vmatpush1.msra.mxu0 %v455
      %502 = vmatprep.subr.mxu0 0.0
      %503 = vmatpush1.msra.mxu0 %v456
      %504 = vmatprep.subr.mxu0 0.0
      %505 = vmatpush1.msra.mxu0 %v457
      %506 = vmatprep.subr.mxu0 0.0
      %507 = vmatpush1.msra.mxu0 %v458
      %508 = vmatprep.subr.mxu0 0.0
      %509 = vmatpush1.msra.mxu0 %v459
      %510 = vmatprep.subr.mxu0 0.0
      %511 = vmatpush1.msra.mxu0 %v460
      %512 = vmatprep.subr.mxu0 0.0
      %513 = vmatpush1.msra.mxu0 %v461
      %514 = vmatprep.subr.mxu0 0.0
      %515 = vmatpush1.msra.mxu0 %v462
      %516 = vmatprep.subr.mxu0 0.0
      %517 = vmatpush1.msra.mxu0 %v463
      %518 = vmatprep.subr.mxu0 0.0
      %519 = vmatpush1.msra.mxu0 %v464
      %520 = vmatprep.subr.mxu0 0.0
      %521 = vmatpush1.msra.mxu0 %v465
      %522 = vmatprep.subr.mxu0 0.0
      %523 = vmatpush1.msra.mxu0 %v466
      %524 = vmatprep.subr.mxu0 0.0
      %525 = vmatpush1.msra.mxu0 %v467
      %526 = vmatprep.subr.mxu0 0.0
      %527 = vmatpush1.msra.mxu0 %v468
      %528 = vmatprep.subr.mxu0 0.0
      %529 = vmatpush1.msra.mxu0 %v469
      %530 = vmatprep.subr.mxu0 0.0
      %531 = vmatpush1.msra.mxu0 %v470
      %532 = vmatprep.subr.mxu0 0.0
      %533 = vmatpush1.msra.mxu0 %v471
      %534 = vmatprep.subr.mxu0 0.0
      %535 = vmatpush1.msra.mxu0 %v472
      %536 = vmatprep.subr.mxu0 0.0
      %537 = vmatpush1.msra.mxu0 %v473
      %538 = vmatprep.subr.mxu0 0.0
      %539 = vmatpush1.msra.mxu0 %v474
      %540 = vmatprep.subr.mxu0 0.0
      %541 = vmatpush1.msra.mxu0 %v475
      %542 = vmatprep.subr.mxu0 0.0
      %543 = vmatpush1.msra.mxu0 %v476
      %544 = vmatprep.subr.mxu0 0.0
      %545 = vmatpush1.msra.mxu0 %v477
      %546 = vmatprep.subr.mxu0 0.0
      %547 = vmatpush1.msra.mxu0 %v478
      %548 = vmatprep.subr.mxu0 0.0
      %549 = vmatpush1.msra.mxu0 %v479
      %550 = vmatprep.subr.mxu0 0.0
      %551 = vmatpush1.msra.mxu0 %v480
      %552 = vmatprep.mubr.f32.mxu0 %v446
      %553 = vmatmul.mubr.f32.gmra.mrb[0].mxu0 %v445
      %v554 = vpop.f32.mrb[0].mxu0
      %v555 = vadd.f32 %v486, %v554
      %v556 = vpop.f32.mrb[0].mxu0
      %557 = vmatprep.mubr.f32.mxu0 %v448
      %558 = vmatmul.mubr.f32.gmra.mrb[0].mxu0 %v447
      %v559 = vpop.f32.mrb[0].mxu0
      %v560 = vadd.f32 %v486, %v559
      %v561 = vpop.f32.mrb[0].mxu0
      %562 = vdwg.mxu0
      %v563 = vlaneseq
      %v564 = vand.u32 %v563, 127
      %vm565 = vcmp.lt.s32.totalorder %v564, 4
      %v566 = vsel %vm565, %v555, -1e+30
      %v567 = vsel %vm565, %v560, -1e+30
      %568 = vmax.xlane.f32.xlu0 %v566
      %v569 = vpop.xlane.xlu0 %568
      %570 = vmax.xlane.f32.xlu0 %v567
      %v571 = vpop.xlane.xlu0 %570
      %v572 = vsub.f32 %v566, %v569
      %v573 = vsub.f32 %v567, %v571
      %v574 = vmul.f32 %v572, 1.442695
      %v575 = vpow.pop %v574
      %v576 = vmul.f32 %v573, 1.442695
      %v577 = vpow.pop %v576
      %578 = vadd.xlane.f32.xlu0 %v575
      %v579 = vpop.xlane.xlu0 %578
      %580 = vadd.xlane.f32.xlu0 %v577
      %v581 = vpop.xlane.xlu0 %580
      %v582 = vlog2.pop %v579
      %v583 = vmul.f32 %v582, 0.6931472
      %v584 = vlog2.pop %v581
      %v585 = vmul.f32 %v584, 0.6931472
      %v586 = vadd.f32 %v569, %v583
      %v587 = vadd.f32 %v571, %v585
      %v588 = vsub.f32 %v566, %v586
      %v589 = vsub.f32 %v567, %v587
      %590 = vst [vmem:[#allocation15] sm:$0xff] %v588
      %591 = vst [vmem:[#allocation15 + $0x8] sm:$0xff] %v589
    $region73: #{tpu_custom_call.1} parent=1 // pred_fallthru
      _
    // Predicated region
    $region74: #{tpu_custom_call.1} parent=1 // pred_check
      _
    $region75: #{tpu_custom_call.1} parent=1 // pred_check_branch
      %593 = sbr.rel (0) target = $region77
    $region76: #{tpu_custom_call.1} parent=1 // pred_region
      %s595 = ssub.s32 256, 256
      %596 = vsyncadd [#allocation6], %s595
      %s597 = sshll.u32 [#allocation15], 4
      %s598 = int_to_ptr.vmem [resolvable:$true] %s597
      %603 = dma.vmem_to_hbm [thread:$0]  %s598, 256, %s10, [#allocation6], 128, 128, 8
    $region77: #{tpu_custom_call.1} parent=1 // pred_fallthru
      _
    // Predicated region
    $region78: #{tpu_custom_call.1} parent=1 // pred_check
      _
    $region79: #{tpu_custom_call.1} parent=1 // pred_check_branch
      %605 = sbr.rel (0) target = $region81
    $region80: #{tpu_custom_call.1} parent=1 // pred_region
      %606 = dma.done [#allocation6], 256
    $region81: #{tpu_custom_call.1} parent=1 // pred_fallthru
      _
    %607 = vsyncpa [#allocation5], 1
    %608 = vsyncpa [#allocation8], 1
    %609 = vsyncpa [#allocation11], 1
    %610 = vsyncpa [#allocation14], 1
    %611 = vsyncpa [#allocation6], 1

</llo_original>
